<compile_context>
chip_gen: v7x
topology: tpu7x:2x2x1
jax: 0.10.0
libtpu: 0.0.40
codegen_flags: <defaults>
</compile_context>

<pallas_src>
import jax
import jax.numpy as jnp
from jax.experimental import pallas as pl
from jax.experimental.pallas import tpu as pltpu


# ----------------------------------------------------------------------------
# Fused Pallas kernel: both RNN directions + final fc, whole sequence in VMEM.
# ----------------------------------------------------------------------------
def birnn_fused_kernel(
    x_ref,          # (S*B, E)  flattened embedded sequence
    wih_f_ref,      # (E, H)    forward  W_ih^T
    whh_f_ref,      # (H, H)    forward  W_hh^T
    b_f_ref,        # (1, H)    forward  b_ih + b_hh
    wih_b_ref,      # (E, H)    backward W_ih^T
    whh_b_ref,      # (H, H)    backward W_hh^T
    b_b_ref,        # (1, H)    backward b_ih + b_hh
    fcw_f_ref,      # (H, O)    fc weight rows for the forward hidden half
    fcw_b_ref,      # (H, O)    fc weight rows for the backward hidden half
    fcb_ref,        # (1, O)    fc bias
    o_ref,          # (B, O)    logits
    xp_f_ref,       # (S*B, H)  VMEM scratch: hoisted forward input projection
    xp_b_ref,       # (S*B, H)  VMEM scratch: hoisted backward input projection
):
    SB, _ = x_ref.shape
    H = whh_f_ref.shape[0]
    B = o_ref.shape[0]
    S = SB // B

    x = x_ref[...]

    # ---- Hoisted input projections: one well-shaped matmul per direction. ----
    xp_f_ref[...] = (
        jnp.dot(x, wih_f_ref[...], preferred_element_type=jnp.float32)
        + b_f_ref[...]
    )
    xp_b_ref[...] = (
        jnp.dot(x, wih_b_ref[...], preferred_element_type=jnp.float32)
        + b_b_ref[...]
    )

    whh_f = whh_f_ref[...]
    whh_b = whh_b_ref[...]

    # ---- Serial recurrence over time, both directions per step. ----
    def step(t, carry):
        h_f, h_b = carry
        off_f = pl.multiple_of(t * B, B)
        off_b = pl.multiple_of((S - 1 - t) * B, B)
        h_f = jnp.tanh(
            xp_f_ref[pl.ds(off_f, B), :]
            + jnp.dot(h_f, whh_f, preferred_element_type=jnp.float32)
        )
        h_b = jnp.tanh(
            xp_b_ref[pl.ds(off_b, B), :]
            + jnp.dot(h_b, whh_b, preferred_element_type=jnp.float32)
        )
        return (h_f, h_b)

    h0 = jnp.zeros((B, H), jnp.float32)
    h_f, h_b = jax.lax.fori_loop(0, S, step, (h0, h0), unroll=True)

    # ---- Fused fc: cat(h_f, h_b) @ W_fc^T + b == h_f @ Wf + h_b @ Wb + b. ----
    o_ref[...] = (
        jnp.dot(h_f, fcw_f_ref[...], preferred_element_type=jnp.float32)
        + jnp.dot(h_b, fcw_b_ref[...], preferred_element_type=jnp.float32)
        + fcb_ref[...]
    ).astype(o_ref.dtype)


# ----------------------------------------------------------------------------
# Wrapper
# ----------------------------------------------------------------------------
def rnn_model_forward(text_ids, params):
    """Replicates RNN.forward for rnn_type='RNN', bidirectional=True,
    num_layers=1, dropout_p=0.0 (eval mode)."""
    S, B = text_ids.shape
    # Embedding lookup stays in plain JAX (gather glue).
    # TODO(synk): embedding gather has no clean small-shape Pallas equivalent.
    embedded = params["embedding"][text_ids]            # (S, B, E)
    E = embedded.shape[-1]
    x_flat = embedded.reshape(S * B, E)                 # (S*B, E)

    H = params["w_hh_fwd_t"].shape[0]
    O = params["fc_w_t"].shape[1]

    vmem_spec = pl.BlockSpec(memory_space=pltpu.MemorySpace.VMEM)

    return pl.pallas_call(
        birnn_fused_kernel,
        out_shape=jax.ShapeDtypeStruct((B, O), jnp.float32),
        in_specs=[vmem_spec] * 10,
        out_specs=vmem_spec,
        scratch_shapes=[
            pltpu.VMEM((S * B, H), jnp.float32),
            pltpu.VMEM((S * B, H), jnp.float32),
        ],
    )(
        x_flat,
        params["w_ih_fwd_t"], params["w_hh_fwd_t"], params["b_fwd"],
        params["w_ih_bwd_t"], params["w_hh_bwd_t"], params["b_bwd"],
        params["fc_w_t"][:H], params["fc_w_t"][H:], params["fc_b"],
    )


# ----------------------------------------------------------------------------
# Pure-JAX reference (sanity check)
# ----------------------------------------------------------------------------
def rnn_model_reference(text_ids, params):
    embedded = params["embedding"][text_ids]

    def one_dir(x_seq, w_ih_t, w_hh_t, b):
        B = x_seq.shape[1]
        H = w_hh_t.shape[0]

        def step(h, x_t):
            h_new = jnp.tanh(x_t @ w_ih_t + h @ w_hh_t + b)
            return h_new, None

        h0 = jnp.zeros((B, H), jnp.float32)
        h_final, _ = jax.lax.scan(step, h0, x_seq)
        return h_final

    h_fwd = one_dir(embedded, params["w_ih_fwd_t"], params["w_hh_fwd_t"], params["b_fwd"])
    h_bwd = one_dir(embedded[::-1], params["w_ih_bwd_t"], params["w_hh_bwd_t"], params["b_bwd"])
    hidden = jnp.concatenate([h_fwd, h_bwd], axis=1)
    return hidden @ params["fc_w_t"] + params["fc_b"]


# ----------------------------------------------------------------------------
# Main
# ----------------------------------------------------------------------------
if __name__ == "__main__":
    vocab_size = 50
    embedding_dim = 16
    hidden_dim = 32
    output_dim = 3
    seq_len = 8
    batch = 8

    key = jax.random.PRNGKey(0)
    keys = jax.random.split(key, 12)
    scale = 1.0 / jnp.sqrt(hidden_dim)

    def u(k, shape, s=scale):
        return jax.random.uniform(k, shape, jnp.float32, -s, s)

    params = {
        # pretrained embeddings (nn.Embedding.from_pretrained)
        "embedding": jax.random.normal(keys[0], (vocab_size, embedding_dim), jnp.float32),
        # forward-direction weights (stored transposed for x @ W^T)
        "w_ih_fwd_t": u(keys[1], (embedding_dim, hidden_dim)),
        "w_hh_fwd_t": u(keys[2], (hidden_dim, hidden_dim)),
        "b_fwd": u(keys[3], (1, hidden_dim)) + u(keys[4], (1, hidden_dim)),  # b_ih + b_hh
        # backward-direction weights
        "w_ih_bwd_t": u(keys[5], (embedding_dim, hidden_dim)),
        "w_hh_bwd_t": u(keys[6], (hidden_dim, hidden_dim)),
        "b_bwd": u(keys[7], (1, hidden_dim)) + u(keys[8], (1, hidden_dim)),
        # fc: Linear(hidden_dim * 2, output_dim)
        "fc_w_t": u(keys[9], (2 * hidden_dim, output_dim), 1.0 / jnp.sqrt(2 * hidden_dim)),
        "fc_b": u(keys[10], (1, output_dim), 1.0 / jnp.sqrt(2 * hidden_dim)),
    }

    # batch.text: (seq_len, batch) int token indices
    text_ids = jax.random.randint(keys[11], (seq_len, batch), 0, vocab_size, jnp.int32)

    out = rnn_model_forward(text_ids, params)
    out = jax.block_until_ready(out)

    ref = rnn_model_reference(text_ids, params)
    assert out.shape == (batch, output_dim)
    assert jnp.allclose(out, ref, atol=1e-4), "mismatch vs reference"

    print("KERNEL_OK")
</pallas_src>

<mosaic_0001>
module attributes {stable_mosaic.version = 11 : i64} {
  func.func @birnn_fused_kernel(%arg0: memref<64x16xf32, #tpu.memory_space<vmem>>, %arg1: memref<16x32xf32, #tpu.memory_space<vmem>>, %arg2: memref<32x32xf32, #tpu.memory_space<vmem>>, %arg3: memref<1x32xf32, #tpu.memory_space<vmem>>, %arg4: memref<16x32xf32, #tpu.memory_space<vmem>>, %arg5: memref<32x32xf32, #tpu.memory_space<vmem>>, %arg6: memref<1x32xf32, #tpu.memory_space<vmem>>, %arg7: memref<32x3xf32, #tpu.memory_space<vmem>>, %arg8: memref<32x3xf32, #tpu.memory_space<vmem>>, %arg9: memref<1x3xf32, #tpu.memory_space<vmem>>, %arg10: memref<8x3xf32, #tpu.memory_space<vmem>>, %arg11: memref<64x32xf32, #tpu.memory_space<vmem>>, %arg12: memref<64x32xf32, #tpu.memory_space<vmem>>) attributes {dimension_semantics = [], scalar_prefetch = 0 : i64, scratch_operands = 2 : i64, tpu.core_type = #tpu.core_type<tc>} {
    %c0 = arith.constant 0 : index
    %c0_0 = arith.constant 0 : index
    %0 = vector.load %arg0[%c0, %c0_0] : memref<64x16xf32, #tpu.memory_space<vmem>>, vector<64x16xf32>
    %c0_1 = arith.constant 0 : index
    %c0_2 = arith.constant 0 : index
    %1 = vector.load %arg1[%c0_1, %c0_2] : memref<16x32xf32, #tpu.memory_space<vmem>>, vector<16x32xf32>
    %cst = arith.constant dense<0.000000e+00> : vector<64x32xf32>
    %2 = tpu.matmul %0, %1, %cst {dimension_numbers = #tpu.dot_dimension_numbers<[1], [0], [0], [1], [0, 0, 1, 1], [], []>} : vector<64x16xf32>, vector<16x32xf32>, vector<64x32xf32> -> vector<64x32xf32>
    %c0_3 = arith.constant 0 : index
    %c0_4 = arith.constant 0 : index
    %3 = vector.load %arg3[%c0_3, %c0_4] : memref<1x32xf32, #tpu.memory_space<vmem>>, vector<1x32xf32>
    %4 = vector.broadcast %3 : vector<1x32xf32> to vector<64x32xf32>
    %5 = arith.addf %2, %4 : vector<64x32xf32>
    %c0_5 = arith.constant 0 : index
    %c0_6 = arith.constant 0 : index
    %6 = vector.load %arg11[%c0_5, %c0_6] : memref<64x32xf32, #tpu.memory_space<vmem>>, vector<64x32xf32>
    tpu.vector_store %arg11[%c0_5, %c0_6], %5 {strides = array<i32>} : memref<64x32xf32, #tpu.memory_space<vmem>>, vector<64x32xf32>,
    %c0_7 = arith.constant 0 : index
    %c0_8 = arith.constant 0 : index
    %7 = vector.load %arg4[%c0_7, %c0_8] : memref<16x32xf32, #tpu.memory_space<vmem>>, vector<16x32xf32>
    %cst_9 = arith.constant dense<0.000000e+00> : vector<64x32xf32>
    %8 = tpu.matmul %0, %7, %cst_9 {dimension_numbers = #tpu.dot_dimension_numbers<[1], [0], [0], [1], [0, 0, 1, 1], [], []>} : vector<64x16xf32>, vector<16x32xf32>, vector<64x32xf32> -> vector<64x32xf32>
    %c0_10 = arith.constant 0 : index
    %c0_11 = arith.constant 0 : index
    %9 = vector.load %arg6[%c0_10, %c0_11] : memref<1x32xf32, #tpu.memory_space<vmem>>, vector<1x32xf32>
    %10 = vector.broadcast %9 : vector<1x32xf32> to vector<64x32xf32>
    %11 = arith.addf %8, %10 : vector<64x32xf32>
    %c0_12 = arith.constant 0 : index
    %c0_13 = arith.constant 0 : index
    %12 = vector.load %arg12[%c0_12, %c0_13] : memref<64x32xf32, #tpu.memory_space<vmem>>, vector<64x32xf32>
    tpu.vector_store %arg12[%c0_12, %c0_13], %11 {strides = array<i32>} : memref<64x32xf32, #tpu.memory_space<vmem>>, vector<64x32xf32>,
    %c0_14 = arith.constant 0 : index
    %c0_15 = arith.constant 0 : index
    %13 = vector.load %arg2[%c0_14, %c0_15] : memref<32x32xf32, #tpu.memory_space<vmem>>, vector<32x32xf32>
    %c0_16 = arith.constant 0 : index
    %c0_17 = arith.constant 0 : index
    %14 = vector.load %arg5[%c0_16, %c0_17] : memref<32x32xf32, #tpu.memory_space<vmem>>, vector<32x32xf32>
    %cst_18 = arith.constant 0.000000e+00 : f32
    %15 = vector.broadcast %cst_18 : f32 to vector<8x32xf32>
    %c0_i32 = arith.constant 0 : i32
    %c8_i32 = arith.constant 8 : i32
    %16 = arith.muli %c0_i32, %c8_i32 : i32
    %17 = tpu.assume_multiple %16, 8 : i32
    %c7_i32 = arith.constant 7 : i32
    %18 = arith.subi %c7_i32, %c0_i32 : i32
    %c8_i32_19 = arith.constant 8 : i32
    %19 = arith.muli %18, %c8_i32_19 : i32
    %20 = tpu.assume_multiple %19, 8 : i32
    %21 = arith.index_cast %17 : i32 to index
    %c0_20 = arith.constant 0 : index
    %22 = vector.load %arg11[%21, %c0_20] : memref<64x32xf32, #tpu.memory_space<vmem>>, vector<8x32xf32>
    %cst_21 = arith.constant dense<0.000000e+00> : vector<8x32xf32>
    %23 = tpu.matmul %15, %13, %cst_21 {dimension_numbers = #tpu.dot_dimension_numbers<[1], [0], [0], [1], [0, 0, 1, 1], [], []>} : vector<8x32xf32>, vector<32x32xf32>, vector<8x32xf32> -> vector<8x32xf32>
    %24 = arith.addf %22, %23 : vector<8x32xf32>
    %25 = math.tanh %24 : vector<8x32xf32>
    %26 = arith.index_cast %20 : i32 to index
    %c0_22 = arith.constant 0 : index
    %27 = vector.load %arg12[%26, %c0_22] : memref<64x32xf32, #tpu.memory_space<vmem>>, vector<8x32xf32>
    %cst_23 = arith.constant dense<0.000000e+00> : vector<8x32xf32>
    %28 = tpu.matmul %15, %14, %cst_23 {dimension_numbers = #tpu.dot_dimension_numbers<[1], [0], [0], [1], [0, 0, 1, 1], [], []>} : vector<8x32xf32>, vector<32x32xf32>, vector<8x32xf32> -> vector<8x32xf32>
    %29 = arith.addf %27, %28 : vector<8x32xf32>
    %30 = math.tanh %29 : vector<8x32xf32>
    %c1_i32 = arith.constant 1 : i32
    %c8_i32_24 = arith.constant 8 : i32
    %31 = arith.muli %c1_i32, %c8_i32_24 : i32
    %32 = tpu.assume_multiple %31, 8 : i32
    %c7_i32_25 = arith.constant 7 : i32
    %33 = arith.subi %c7_i32_25, %c1_i32 : i32
    %c8_i32_26 = arith.constant 8 : i32
    %34 = arith.muli %33, %c8_i32_26 : i32
    %35 = tpu.assume_multiple %34, 8 : i32
    %36 = arith.index_cast %32 : i32 to index
    %c0_27 = arith.constant 0 : index
    %37 = vector.load %arg11[%36, %c0_27] : memref<64x32xf32, #tpu.memory_space<vmem>>, vector<8x32xf32>
    %cst_28 = arith.constant dense<0.000000e+00> : vector<8x32xf32>
    %38 = tpu.matmul %25, %13, %cst_28 {dimension_numbers = #tpu.dot_dimension_numbers<[1], [0], [0], [1], [0, 0, 1, 1], [], []>} : vector<8x32xf32>, vector<32x32xf32>, vector<8x32xf32> -> vector<8x32xf32>
    %39 = arith.addf %37, %38 : vector<8x32xf32>
    %40 = math.tanh %39 : vector<8x32xf32>
    %41 = arith.index_cast %35 : i32 to index
    %c0_29 = arith.constant 0 : index
    %42 = vector.load %arg12[%41, %c0_29] : memref<64x32xf32, #tpu.memory_space<vmem>>, vector<8x32xf32>
    %cst_30 = arith.constant dense<0.000000e+00> : vector<8x32xf32>
    %43 = tpu.matmul %30, %14, %cst_30 {dimension_numbers = #tpu.dot_dimension_numbers<[1], [0], [0], [1], [0, 0, 1, 1], [], []>} : vector<8x32xf32>, vector<32x32xf32>, vector<8x32xf32> -> vector<8x32xf32>
    %44 = arith.addf %42, %43 : vector<8x32xf32>
    %45 = math.tanh %44 : vector<8x32xf32>
    %c2_i32 = arith.constant 2 : i32
    %c8_i32_31 = arith.constant 8 : i32
    %46 = arith.muli %c2_i32, %c8_i32_31 : i32
    %47 = tpu.assume_multiple %46, 8 : i32
    %c7_i32_32 = arith.constant 7 : i32
    %48 = arith.subi %c7_i32_32, %c2_i32 : i32
    %c8_i32_33 = arith.constant 8 : i32
    %49 = arith.muli %48, %c8_i32_33 : i32
    %50 = tpu.assume_multiple %49, 8 : i32
    %51 = arith.index_cast %47 : i32 to index
    %c0_34 = arith.constant 0 : index
    %52 = vector.load %arg11[%51, %c0_34] : memref<64x32xf32, #tpu.memory_space<vmem>>, vector<8x32xf32>
    %cst_35 = arith.constant dense<0.000000e+00> : vector<8x32xf32>
    %53 = tpu.matmul %40, %13, %cst_35 {dimension_numbers = #tpu.dot_dimension_numbers<[1], [0], [0], [1], [0, 0, 1, 1], [], []>} : vector<8x32xf32>, vector<32x32xf32>, vector<8x32xf32> -> vector<8x32xf32>
    %54 = arith.addf %52, %53 : vector<8x32xf32>
    %55 = math.tanh %54 : vector<8x32xf32>
    %56 = arith.index_cast %50 : i32 to index
    %c0_36 = arith.constant 0 : index
    %57 = vector.load %arg12[%56, %c0_36] : memref<64x32xf32, #tpu.memory_space<vmem>>, vector<8x32xf32>
    %cst_37 = arith.constant dense<0.000000e+00> : vector<8x32xf32>
    %58 = tpu.matmul %45, %14, %cst_37 {dimension_numbers = #tpu.dot_dimension_numbers<[1], [0], [0], [1], [0, 0, 1, 1], [], []>} : vector<8x32xf32>, vector<32x32xf32>, vector<8x32xf32> -> vector<8x32xf32>
    %59 = arith.addf %57, %58 : vector<8x32xf32>
    %60 = math.tanh %59 : vector<8x32xf32>
    %c3_i32 = arith.constant 3 : i32
    %c8_i32_38 = arith.constant 8 : i32
    %61 = arith.muli %c3_i32, %c8_i32_38 : i32
    %62 = tpu.assume_multiple %61, 8 : i32
    %c7_i32_39 = arith.constant 7 : i32
    %63 = arith.subi %c7_i32_39, %c3_i32 : i32
    %c8_i32_40 = arith.constant 8 : i32
    %64 = arith.muli %63, %c8_i32_40 : i32
    %65 = tpu.assume_multiple %64, 8 : i32
    %66 = arith.index_cast %62 : i32 to index
    %c0_41 = arith.constant 0 : index
    %67 = vector.load %arg11[%66, %c0_41] : memref<64x32xf32, #tpu.memory_space<vmem>>, vector<8x32xf32>
    %cst_42 = arith.constant dense<0.000000e+00> : vector<8x32xf32>
    %68 = tpu.matmul %55, %13, %cst_42 {dimension_numbers = #tpu.dot_dimension_numbers<[1], [0], [0], [1], [0, 0, 1, 1], [], []>} : vector<8x32xf32>, vector<32x32xf32>, vector<8x32xf32> -> vector<8x32xf32>
    %69 = arith.addf %67, %68 : vector<8x32xf32>
    %70 = math.tanh %69 : vector<8x32xf32>
    %71 = arith.index_cast %65 : i32 to index
    %c0_43 = arith.constant 0 : index
    %72 = vector.load %arg12[%71, %c0_43] : memref<64x32xf32, #tpu.memory_space<vmem>>, vector<8x32xf32>
    %cst_44 = arith.constant dense<0.000000e+00> : vector<8x32xf32>
    %73 = tpu.matmul %60, %14, %cst_44 {dimension_numbers = #tpu.dot_dimension_numbers<[1], [0], [0], [1], [0, 0, 1, 1], [], []>} : vector<8x32xf32>, vector<32x32xf32>, vector<8x32xf32> -> vector<8x32xf32>
    %74 = arith.addf %72, %73 : vector<8x32xf32>
    %75 = math.tanh %74 : vector<8x32xf32>
    %c4_i32 = arith.constant 4 : i32
    %c8_i32_45 = arith.constant 8 : i32
    %76 = arith.muli %c4_i32, %c8_i32_45 : i32
    %77 = tpu.assume_multiple %76, 8 : i32
    %c7_i32_46 = arith.constant 7 : i32
    %78 = arith.subi %c7_i32_46, %c4_i32 : i32
    %c8_i32_47 = arith.constant 8 : i32
    %79 = arith.muli %78, %c8_i32_47 : i32
    %80 = tpu.assume_multiple %79, 8 : i32
    %81 = arith.index_cast %77 : i32 to index
    %c0_48 = arith.constant 0 : index
    %82 = vector.load %arg11[%81, %c0_48] : memref<64x32xf32, #tpu.memory_space<vmem>>, vector<8x32xf32>
    %cst_49 = arith.constant dense<0.000000e+00> : vector<8x32xf32>
    %83 = tpu.matmul %70, %13, %cst_49 {dimension_numbers = #tpu.dot_dimension_numbers<[1], [0], [0], [1], [0, 0, 1, 1], [], []>} : vector<8x32xf32>, vector<32x32xf32>, vector<8x32xf32> -> vector<8x32xf32>
    %84 = arith.addf %82, %83 : vector<8x32xf32>
    %85 = math.tanh %84 : vector<8x32xf32>
    %86 = arith.index_cast %80 : i32 to index
    %c0_50 = arith.constant 0 : index
    %87 = vector.load %arg12[%86, %c0_50] : memref<64x32xf32, #tpu.memory_space<vmem>>, vector<8x32xf32>
    %cst_51 = arith.constant dense<0.000000e+00> : vector<8x32xf32>
    %88 = tpu.matmul %75, %14, %cst_51 {dimension_numbers = #tpu.dot_dimension_numbers<[1], [0], [0], [1], [0, 0, 1, 1], [], []>} : vector<8x32xf32>, vector<32x32xf32>, vector<8x32xf32> -> vector<8x32xf32>
    %89 = arith.addf %87, %88 : vector<8x32xf32>
    %90 = math.tanh %89 : vector<8x32xf32>
    %c5_i32 = arith.constant 5 : i32
    %c8_i32_52 = arith.constant 8 : i32
    %91 = arith.muli %c5_i32, %c8_i32_52 : i32
    %92 = tpu.assume_multiple %91, 8 : i32
    %c7_i32_53 = arith.constant 7 : i32
    %93 = arith.subi %c7_i32_53, %c5_i32 : i32
    %c8_i32_54 = arith.constant 8 : i32
    %94 = arith.muli %93, %c8_i32_54 : i32
    %95 = tpu.assume_multiple %94, 8 : i32
    %96 = arith.index_cast %92 : i32 to index
    %c0_55 = arith.constant 0 : index
    %97 = vector.load %arg11[%96, %c0_55] : memref<64x32xf32, #tpu.memory_space<vmem>>, vector<8x32xf32>
    %cst_56 = arith.constant dense<0.000000e+00> : vector<8x32xf32>
    %98 = tpu.matmul %85, %13, %cst_56 {dimension_numbers = #tpu.dot_dimension_numbers<[1], [0], [0], [1], [0, 0, 1, 1], [], []>} : vector<8x32xf32>, vector<32x32xf32>, vector<8x32xf32> -> vector<8x32xf32>
    %99 = arith.addf %97, %98 : vector<8x32xf32>
    %100 = math.tanh %99 : vector<8x32xf32>
    %101 = arith.index_cast %95 : i32 to index
    %c0_57 = arith.constant 0 : index
    %102 = vector.load %arg12[%101, %c0_57] : memref<64x32xf32, #tpu.memory_space<vmem>>, vector<8x32xf32>
    %cst_58 = arith.constant dense<0.000000e+00> : vector<8x32xf32>
    %103 = tpu.matmul %90, %14, %cst_58 {dimension_numbers = #tpu.dot_dimension_numbers<[1], [0], [0], [1], [0, 0, 1, 1], [], []>} : vector<8x32xf32>, vector<32x32xf32>, vector<8x32xf32> -> vector<8x32xf32>
    %104 = arith.addf %102, %103 : vector<8x32xf32>
    %105 = math.tanh %104 : vector<8x32xf32>
    %c6_i32 = arith.constant 6 : i32
    %c8_i32_59 = arith.constant 8 : i32
    %106 = arith.muli %c6_i32, %c8_i32_59 : i32
    %107 = tpu.assume_multiple %106, 8 : i32
    %c7_i32_60 = arith.constant 7 : i32
    %108 = arith.subi %c7_i32_60, %c6_i32 : i32
    %c8_i32_61 = arith.constant 8 : i32
    %109 = arith.muli %108, %c8_i32_61 : i32
    %110 = tpu.assume_multiple %109, 8 : i32
    %111 = arith.index_cast %107 : i32 to index
    %c0_62 = arith.constant 0 : index
    %112 = vector.load %arg11[%111, %c0_62] : memref<64x32xf32, #tpu.memory_space<vmem>>, vector<8x32xf32>
    %cst_63 = arith.constant dense<0.000000e+00> : vector<8x32xf32>
    %113 = tpu.matmul %100, %13, %cst_63 {dimension_numbers = #tpu.dot_dimension_numbers<[1], [0], [0], [1], [0, 0, 1, 1], [], []>} : vector<8x32xf32>, vector<32x32xf32>, vector<8x32xf32> -> vector<8x32xf32>
    %114 = arith.addf %112, %113 : vector<8x32xf32>
    %115 = math.tanh %114 : vector<8x32xf32>
    %116 = arith.index_cast %110 : i32 to index
    %c0_64 = arith.constant 0 : index
    %117 = vector.load %arg12[%116, %c0_64] : memref<64x32xf32, #tpu.memory_space<vmem>>, vector<8x32xf32>
    %cst_65 = arith.constant dense<0.000000e+00> : vector<8x32xf32>
    %118 = tpu.matmul %105, %14, %cst_65 {dimension_numbers = #tpu.dot_dimension_numbers<[1], [0], [0], [1], [0, 0, 1, 1], [], []>} : vector<8x32xf32>, vector<32x32xf32>, vector<8x32xf32> -> vector<8x32xf32>
    %119 = arith.addf %117, %118 : vector<8x32xf32>
    %120 = math.tanh %119 : vector<8x32xf32>
    %c7_i32_66 = arith.constant 7 : i32
    %c8_i32_67 = arith.constant 8 : i32
    %121 = arith.muli %c7_i32_66, %c8_i32_67 : i32
    %122 = tpu.assume_multiple %121, 8 : i32
    %c7_i32_68 = arith.constant 7 : i32
    %123 = arith.subi %c7_i32_68, %c7_i32_66 : i32
    %c8_i32_69 = arith.constant 8 : i32
    %124 = arith.muli %123, %c8_i32_69 : i32
    %125 = tpu.assume_multiple %124, 8 : i32
    %126 = arith.index_cast %122 : i32 to index
    %c0_70 = arith.constant 0 : index
    %127 = vector.load %arg11[%126, %c0_70] : memref<64x32xf32, #tpu.memory_space<vmem>>, vector<8x32xf32>
    %cst_71 = arith.constant dense<0.000000e+00> : vector<8x32xf32>
    %128 = tpu.matmul %115, %13, %cst_71 {dimension_numbers = #tpu.dot_dimension_numbers<[1], [0], [0], [1], [0, 0, 1, 1], [], []>} : vector<8x32xf32>, vector<32x32xf32>, vector<8x32xf32> -> vector<8x32xf32>
    %129 = arith.addf %127, %128 : vector<8x32xf32>
    %130 = math.tanh %129 : vector<8x32xf32>
    %131 = arith.index_cast %125 : i32 to index
    %c0_72 = arith.constant 0 : index
    %132 = vector.load %arg12[%131, %c0_72] : memref<64x32xf32, #tpu.memory_space<vmem>>, vector<8x32xf32>
    %cst_73 = arith.constant dense<0.000000e+00> : vector<8x32xf32>
    %133 = tpu.matmul %120, %14, %cst_73 {dimension_numbers = #tpu.dot_dimension_numbers<[1], [0], [0], [1], [0, 0, 1, 1], [], []>} : vector<8x32xf32>, vector<32x32xf32>, vector<8x32xf32> -> vector<8x32xf32>
    %134 = arith.addf %132, %133 : vector<8x32xf32>
    %135 = math.tanh %134 : vector<8x32xf32>
    %c8_i32_74 = arith.constant 8 : i32
    %c0_75 = arith.constant 0 : index
    %c0_76 = arith.constant 0 : index
    %136 = vector.load %arg7[%c0_75, %c0_76] : memref<32x3xf32, #tpu.memory_space<vmem>>, vector<32x3xf32>
    %cst_77 = arith.constant dense<0.000000e+00> : vector<8x3xf32>
    %137 = tpu.matmul %130, %136, %cst_77 {dimension_numbers = #tpu.dot_dimension_numbers<[1], [0], [0], [1], [0, 0, 1, 1], [], []>} : vector<8x32xf32>, vector<32x3xf32>, vector<8x3xf32> -> vector<8x3xf32>
    %c0_78 = arith.constant 0 : index
    %c0_79 = arith.constant 0 : index
    %138 = vector.load %arg8[%c0_78, %c0_79] : memref<32x3xf32, #tpu.memory_space<vmem>>, vector<32x3xf32>
    %cst_80 = arith.constant dense<0.000000e+00> : vector<8x3xf32>
    %139 = tpu.matmul %135, %138, %cst_80 {dimension_numbers = #tpu.dot_dimension_numbers<[1], [0], [0], [1], [0, 0, 1, 1], [], []>} : vector<8x32xf32>, vector<32x3xf32>, vector<8x3xf32> -> vector<8x3xf32>
    %140 = arith.addf %137, %139 : vector<8x3xf32>
    %c0_81 = arith.constant 0 : index
    %c0_82 = arith.constant 0 : index
    %141 = vector.load %arg9[%c0_81, %c0_82] : memref<1x3xf32, #tpu.memory_space<vmem>>, vector<1x3xf32>
    %142 = vector.broadcast %141 : vector<1x3xf32> to vector<8x3xf32>
    %143 = arith.addf %140, %142 : vector<8x3xf32>
    %c0_83 = arith.constant 0 : index
    %c0_84 = arith.constant 0 : index
    %144 = vector.load %arg10[%c0_83, %c0_84] : memref<8x3xf32, #tpu.memory_space<vmem>>, vector<8x3xf32>
    tpu.vector_store %arg10[%c0_83, %c0_84], %143 {strides = array<i32>} : memref<8x3xf32, #tpu.memory_space<vmem>>, vector<8x3xf32>,
    return
  }
}

</mosaic_0001>

<llo_original>
// kernel: tpu_custom_call.1
$region0: #{tpu_custom_call.1}
  #allocation0 [shape = 'u32[]', space=smem, size = 0x4, offset = 0x4, fixed_abs, tag = 'smem constant byte address 0x4 - core index']
  #allocation1 [shape = 'u32[144,128]{1,0:T(1,128)}', space=vmem, size = 0x12000, scoped, tag = 'internal scratch']
  #allocation2 [shape = 'f32[64,32]{1,0:T(8,128)}', space=vmem, size = 0x8000, scoped, tag = 'scratch operand']
  #allocation3 [shape = 'f32[64,32]{1,0:T(8,128)}', space=vmem, size = 0x8000, scoped, tag = 'scratch operand']
  %s0 = inlined_call_operand.vmem [shape: f32[64,16], index: 0, kind: input, shape index: {}]
  %s1 = inlined_call_operand.vmem [shape: f32[16,32], index: 1, kind: input, shape index: {}]
  %s2 = inlined_call_operand.vmem [shape: f32[32,32], index: 2, kind: input, shape index: {}]
  %s3 = inlined_call_operand.vmem [shape: f32[1,32], index: 3, kind: input, shape index: {}]
  %s4 = inlined_call_operand.vmem [shape: f32[16,32], index: 4, kind: input, shape index: {}]
  %s5 = inlined_call_operand.vmem [shape: f32[32,32], index: 5, kind: input, shape index: {}]
  %s6 = inlined_call_operand.vmem [shape: f32[1,32], index: 6, kind: input, shape index: {}]
  %s7 = inlined_call_operand.vmem [shape: f32[32,3], index: 7, kind: input, shape index: {}]
  %s8 = inlined_call_operand.vmem [shape: f32[32,3], index: 8, kind: input, shape index: {}]
  %s9 = inlined_call_operand.vmem [shape: f32[1,3], index: 9, kind: input, shape index: {}]
  %s10 = inlined_call_operand.vmem [shape: f32[8,3], index: 10, kind: output, shape index: {}]
  %s11 = sld [smem:[#allocation0]]
  $region50: #{tpu_custom_call.1} parent=0
    _
  %s13 = ssub.s32 1, %s11
  %s14 = scalar_select 0, %s13, %s11
  // Predicated region
  $region2: #{tpu_custom_call.1} parent=0 // pred_check
    _
  $region3: #{tpu_custom_call.1} parent=0 // pred_check_branch
    %16 = sbr.rel (0) target = $region5
  $region4: #{tpu_custom_call.1} parent=0 // pred_region
    _
  $region5: #{tpu_custom_call.1} parent=0 // pred_fallthru
    _
  // Predicated region
  $region6: #{tpu_custom_call.1} parent=0 // pred_check
    _
  $region7: #{tpu_custom_call.1} parent=0 // pred_check_branch
    %18 = sbr.rel (0) target = $region9
  $region8: #{tpu_custom_call.1} parent=0 // pred_region
    _
  $region9: #{tpu_custom_call.1} parent=0 // pred_fallthru
    _
  // Predicated region
  $region10: #{tpu_custom_call.1} parent=0 // pred_check
    _
  $region11: #{tpu_custom_call.1} parent=0 // pred_check_branch
    %20 = sbr.rel (0) target = $region13
  $region12: #{tpu_custom_call.1} parent=0 // pred_region
    _
  $region13: #{tpu_custom_call.1} parent=0 // pred_fallthru
    _
  // Predicated region
  $region14: #{tpu_custom_call.1} parent=0 // pred_check
    _
  $region15: #{tpu_custom_call.1} parent=0 // pred_check_branch
    %22 = sbr.rel (0) target = $region17
  $region16: #{tpu_custom_call.1} parent=0 // pred_region
    _
  $region17: #{tpu_custom_call.1} parent=0 // pred_fallthru
    _
  // Predicated region
  $region18: #{tpu_custom_call.1} parent=0 // pred_check
    _
  $region19: #{tpu_custom_call.1} parent=0 // pred_check_branch
    %24 = sbr.rel (0) target = $region21
  $region20: #{tpu_custom_call.1} parent=0 // pred_region
    _
  $region21: #{tpu_custom_call.1} parent=0 // pred_fallthru
    _
  // Predicated region
  $region22: #{tpu_custom_call.1} parent=0 // pred_check
    _
  $region23: #{tpu_custom_call.1} parent=0 // pred_check_branch
    %26 = sbr.rel (0) target = $region25
  $region24: #{tpu_custom_call.1} parent=0 // pred_region
    _
  $region25: #{tpu_custom_call.1} parent=0 // pred_fallthru
    _
  // Predicated region
  $region26: #{tpu_custom_call.1} parent=0 // pred_check
    _
  $region27: #{tpu_custom_call.1} parent=0 // pred_check_branch
    %28 = sbr.rel (0) target = $region29
  $region28: #{tpu_custom_call.1} parent=0 // pred_region
    _
  $region29: #{tpu_custom_call.1} parent=0 // pred_fallthru
    _
  // Predicated region
  $region30: #{tpu_custom_call.1} parent=0 // pred_check
    _
  $region31: #{tpu_custom_call.1} parent=0 // pred_check_branch
    %30 = sbr.rel (0) target = $region33
  $region32: #{tpu_custom_call.1} parent=0 // pred_region
    _
  $region33: #{tpu_custom_call.1} parent=0 // pred_fallthru
    _
  // Predicated region
  $region34: #{tpu_custom_call.1} parent=0 // pred_check
    _
  $region35: #{tpu_custom_call.1} parent=0 // pred_check_branch
    %32 = sbr.rel (0) target = $region37
  $region36: #{tpu_custom_call.1} parent=0 // pred_region
    _
  $region37: #{tpu_custom_call.1} parent=0 // pred_fallthru
    _
  // Predicated region
  $region38: #{tpu_custom_call.1} parent=0 // pred_check
    _
  $region39: #{tpu_custom_call.1} parent=0 // pred_check_branch
    %34 = sbr.rel (0) target = $region41
  $region40: #{tpu_custom_call.1} parent=0 // pred_region
    _
  $region41: #{tpu_custom_call.1} parent=0 // pred_fallthru
    _
  %v35 = vld [vmem:[%s0] sm:$0xff]
  %v36 = vld [vmem:[%s0 + $0x8] sm:$0xff]
  %v37 = vld [vmem:[%s0 + $0x10] sm:$0xff]
  %v38 = vld [vmem:[%s0 + $0x18] sm:$0xff]
  %v39 = vld [vmem:[%s0 + $0x20] sm:$0xff]
  %v40 = vld [vmem:[%s0 + $0x28] sm:$0xff]
  %v41 = vld [vmem:[%s0 + $0x30] sm:$0xff]
  %v42 = vld [vmem:[%s0 + $0x38] sm:$0xff]
  %v43 = vld [vmem:[%s1] sm:$0xff]
  %v44 = vld [vmem:[%s1 + $0x8] sm:$0xff]
  %v45 = vld [vmem:[%s3] sm:$0x1]
  %v47 = vlaneseq
  %v48 = vshrl.u32 %v47, 7
  %v49 = vsub.s32 0, %v48
  %v50 = vrot.slane %v45, %v49
  %vm52 = vcmask 130048
  %v54 = vsel %vm52, %v35, 0
  %v57 = vsel %vm52, %v36, 0
  %v60 = vsel %vm52, %v37, 0
  %v63 = vsel %vm52, %v38, 0
  %v66 = vsel %vm52, %v39, 0
  %v69 = vsel %vm52, %v40, 0
  %v72 = vsel %vm52, %v41, 0
  %v75 = vsel %vm52, %v42, 0
  %77 = vmatprep.subr.mxu0 0.0
  %78 = vmatpush1.msra.mxu0 %v43
  %79 = vmatprep.subr.mxu0 0.0
  %80 = vmatpush1.msra.mxu0 %v44
  %81 = vmatprep.subr.mxu0 0.0
  %82 = vmatpush1.msra.mxu0 0.0
  %83 = vmatprep.subr.mxu0 0.0
  %84 = vmatpush1.msra.mxu0 0.0
  %85 = vmatprep.subr.mxu0 0.0
  %86 = vmatpush1.msra.mxu0 0.0
  %87 = vmatprep.subr.mxu0 0.0
  %88 = vmatpush1.msra.mxu0 0.0
  %89 = vmatprep.subr.mxu0 0.0
  %90 = vmatpush1.msra.mxu0 0.0
  %91 = vmatprep.subr.mxu0 0.0
  %92 = vmatpush1.msra.mxu0 0.0
  %93 = vmatprep.subr.mxu0 0.0
  %94 = vmatpush1.msra.mxu0 0.0
  %95 = vmatprep.subr.mxu0 0.0
  %96 = vmatpush1.msra.mxu0 0.0
  %97 = vmatprep.subr.mxu0 0.0
  %98 = vmatpush1.msra.mxu0 0.0
  %99 = vmatprep.subr.mxu0 0.0
  %100 = vmatpush1.msra.mxu0 0.0
  %101 = vmatprep.subr.mxu0 0.0
  %102 = vmatpush1.msra.mxu0 0.0
  %103 = vmatprep.subr.mxu0 0.0
  %104 = vmatpush1.msra.mxu0 0.0
  %105 = vmatprep.subr.mxu0 0.0
  %106 = vmatpush1.msra.mxu0 0.0
  %107 = vmatprep.subr.mxu0 0.0
  %108 = vmatpush1.msra.mxu0 0.0
  %109 = vmatprep.subr.mxu0 0.0
  %110 = vmatpush1.msra.mxu0 0.0
  %111 = vmatprep.subr.mxu0 0.0
  %112 = vmatpush1.msra.mxu0 0.0
  %113 = vmatprep.subr.mxu0 0.0
  %114 = vmatpush1.msra.mxu0 0.0
  %115 = vmatprep.subr.mxu0 0.0
  %116 = vmatpush1.msra.mxu0 0.0
  %117 = vmatprep.subr.mxu0 0.0
  %118 = vmatpush1.msra.mxu0 0.0
  %119 = vmatprep.subr.mxu0 0.0
  %120 = vmatpush1.msra.mxu0 0.0
  %121 = vmatprep.subr.mxu0 0.0
  %122 = vmatpush1.msra.mxu0 0.0
  %123 = vmatprep.subr.mxu0 0.0
  %124 = vmatpush1.msra.mxu0 0.0
  %125 = vmatprep.subr.mxu0 0.0
  %126 = vmatpush1.msra.mxu0 0.0
  %127 = vmatprep.subr.mxu0 0.0
  %128 = vmatpush1.msra.mxu0 0.0
  %129 = vmatprep.subr.mxu0 0.0
  %130 = vmatpush1.msra.mxu0 0.0
  %131 = vmatprep.subr.mxu0 0.0
  %132 = vmatpush1.msra.mxu0 0.0
  %133 = vmatprep.subr.mxu0 0.0
  %134 = vmatpush1.msra.mxu0 0.0
  %135 = vmatprep.subr.mxu0 0.0
  %136 = vmatpush1.msra.mxu0 0.0
  %137 = vmatprep.subr.mxu0 0.0
  %138 = vmatpush1.msra.mxu0 0.0
  %139 = vmatprep.subr.mxu0 0.0
  %140 = vmatpush1.msra.mxu0 0.0
  %141 = vmatprep.mubr.f32.mxu0 0.0
  %142 = vmatmul.mubr.f32.gmra.mrb[0].mxu0 %v54
  %v143 = vpop.f32.mrb[0].mxu0
  %v144 = vadd.f32 %v50, %v143
  %v145 = vpop.f32.mrb[0].mxu0
  %146 = vmatprep.mubr.f32.mxu0 0.0
  %147 = vmatmul.mubr.f32.gmra.mrb[0].mxu0 %v57
  %v148 = vpop.f32.mrb[0].mxu0
  %v149 = vadd.f32 %v50, %v148
  %v150 = vpop.f32.mrb[0].mxu0
  %151 = vmatprep.mubr.f32.mxu0 0.0
  %152 = vmatmul.mubr.f32.gmra.mrb[0].mxu0 %v60
  %v153 = vpop.f32.mrb[0].mxu0
  %v154 = vadd.f32 %v50, %v153
  %v155 = vpop.f32.mrb[0].mxu0
  %156 = vmatprep.mubr.f32.mxu0 0.0
  %157 = vmatmul.mubr.f32.gmra.mrb[0].mxu0 %v63
  %v158 = vpop.f32.mrb[0].mxu0
  %v159 = vadd.f32 %v50, %v158
  %v160 = vpop.f32.mrb[0].mxu0
  %161 = vmatprep.mubr.f32.mxu0 0.0
  %162 = vmatmul.mubr.f32.gmra.mrb[0].mxu0 %v66
  %v163 = vpop.f32.mrb[0].mxu0
  %v164 = vadd.f32 %v50, %v163
  %v165 = vpop.f32.mrb[0].mxu0
  %166 = vmatprep.mubr.f32.mxu0 0.0
  %167 = vmatmul.mubr.f32.gmra.mrb[0].mxu0 %v69
  %v168 = vpop.f32.mrb[0].mxu0
  %v169 = vadd.f32 %v50, %v168
  %v170 = vpop.f32.mrb[0].mxu0
  %171 = vmatprep.mubr.f32.mxu0 0.0
  %172 = vmatmul.mubr.f32.gmra.mrb[0].mxu0 %v72
  %v173 = vpop.f32.mrb[0].mxu0
  %v174 = vadd.f32 %v50, %v173
  %v175 = vpop.f32.mrb[0].mxu0
  %176 = vmatprep.mubr.f32.mxu0 0.0
  %177 = vmatmul.mubr.f32.gmra.mrb[0].mxu0 %v75
  %v178 = vpop.f32.mrb[0].mxu0
  %v179 = vadd.f32 %v50, %v178
  %v180 = vpop.f32.mrb[0].mxu0
  %181 = vdwg.mxu0
  %vm182 = vcmask 261120
  %183 = vst.msk [vmem:[#allocation2] sm:$0xff] %vm182, %v144
  %184 = vst.msk [vmem:[#allocation2 + $0x8] sm:$0xff] %vm182, %v149
  %185 = vst.msk [vmem:[#allocation2 + $0x10] sm:$0xff] %vm182, %v154
  %186 = vst.msk [vmem:[#allocation2 + $0x18] sm:$0xff] %vm182, %v159
  %187 = vst.msk [vmem:[#allocation2 + $0x20] sm:$0xff] %vm182, %v164
  %188 = vst.msk [vmem:[#allocation2 + $0x28] sm:$0xff] %vm182, %v169
  %189 = vst.msk [vmem:[#allocation2 + $0x30] sm:$0xff] %vm182, %v174
  %190 = vst.msk [vmem:[#allocation2 + $0x38] sm:$0xff] %vm182, %v179
  %v191 = vld [vmem:[%s4] sm:$0xff]
  %v192 = vld [vmem:[%s4 + $0x8] sm:$0xff]
  %v193 = vld [vmem:[%s6] sm:$0x1]
  %v195 = vlaneseq
  %v196 = vshrl.u32 %v195, 7
  %v197 = vsub.s32 0, %v196
  %v198 = vrot.slane %v193, %v197
  %200 = vmatprep.subr.mxu0 0.0
  %201 = vmatpush1.msra.mxu0 %v191
  %202 = vmatprep.subr.mxu0 0.0
  %203 = vmatpush1.msra.mxu0 %v192
  %204 = vmatprep.subr.mxu0 0.0
  %205 = vmatpush1.msra.mxu0 0.0
  %206 = vmatprep.subr.mxu0 0.0
  %207 = vmatpush1.msra.mxu0 0.0
  %208 = vmatprep.subr.mxu0 0.0
  %209 = vmatpush1.msra.mxu0 0.0
  %210 = vmatprep.subr.mxu0 0.0
  %211 = vmatpush1.msra.mxu0 0.0
  %212 = vmatprep.subr.mxu0 0.0
  %213 = vmatpush1.msra.mxu0 0.0
  %214 = vmatprep.subr.mxu0 0.0
  %215 = vmatpush1.msra.mxu0 0.0
  %216 = vmatprep.subr.mxu0 0.0
  %217 = vmatpush1.msra.mxu0 0.0
  %218 = vmatprep.subr.mxu0 0.0
  %219 = vmatpush1.msra.mxu0 0.0
  %220 = vmatprep.subr.mxu0 0.0
  %221 = vmatpush1.msra.mxu0 0.0
  %222 = vmatprep.subr.mxu0 0.0
  %223 = vmatpush1.msra.mxu0 0.0
  %224 = vmatprep.subr.mxu0 0.0
  %225 = vmatpush1.msra.mxu0 0.0
  %226 = vmatprep.subr.mxu0 0.0
  %227 = vmatpush1.msra.mxu0 0.0
  %228 = vmatprep.subr.mxu0 0.0
  %229 = vmatpush1.msra.mxu0 0.0
  %230 = vmatprep.subr.mxu0 0.0
  %231 = vmatpush1.msra.mxu0 0.0
  %232 = vmatprep.subr.mxu0 0.0
  %233 = vmatpush1.msra.mxu0 0.0
  %234 = vmatprep.subr.mxu0 0.0
  %235 = vmatpush1.msra.mxu0 0.0
  %236 = vmatprep.subr.mxu0 0.0
  %237 = vmatpush1.msra.mxu0 0.0
  %238 = vmatprep.subr.mxu0 0.0
  %239 = vmatpush1.msra.mxu0 0.0
  %240 = vmatprep.subr.mxu0 0.0
  %241 = vmatpush1.msra.mxu0 0.0
  %242 = vmatprep.subr.mxu0 0.0
  %243 = vmatpush1.msra.mxu0 0.0
  %244 = vmatprep.subr.mxu0 0.0
  %245 = vmatpush1.msra.mxu0 0.0
  %246 = vmatprep.subr.mxu0 0.0
  %247 = vmatpush1.msra.mxu0 0.0
  %248 = vmatprep.subr.mxu0 0.0
  %249 = vmatpush1.msra.mxu0 0.0
  %250 = vmatprep.subr.mxu0 0.0
  %251 = vmatpush1.msra.mxu0 0.0
  %252 = vmatprep.subr.mxu0 0.0
  %253 = vmatpush1.msra.mxu0 0.0
  %254 = vmatprep.subr.mxu0 0.0
  %255 = vmatpush1.msra.mxu0 0.0
  %256 = vmatprep.subr.mxu0 0.0
  %257 = vmatpush1.msra.mxu0 0.0
  %258 = vmatprep.subr.mxu0 0.0
  %259 = vmatpush1.msra.mxu0 0.0
  %260 = vmatprep.subr.mxu0 0.0
  %261 = vmatpush1.msra.mxu0 0.0
  %262 = vmatprep.subr.mxu0 0.0
  %263 = vmatpush1.msra.mxu0 0.0
  %264 = vmatprep.mubr.f32.mxu0 0.0
  %265 = vmatmul.mubr.f32.gmra.mrb[0].mxu0 %v54
  %v266 = vpop.f32.mrb[0].mxu0
  %v267 = vadd.f32 %v198, %v266
  %v268 = vpop.f32.mrb[0].mxu0
  %269 = vmatprep.mubr.f32.mxu0 0.0
  %270 = vmatmul.mubr.f32.gmra.mrb[0].mxu0 %v57
  %v271 = vpop.f32.mrb[0].mxu0
  %v272 = vadd.f32 %v198, %v271
  %v273 = vpop.f32.mrb[0].mxu0
  %274 = vmatprep.mubr.f32.mxu0 0.0
  %275 = vmatmul.mubr.f32.gmra.mrb[0].mxu0 %v60
  %v276 = vpop.f32.mrb[0].mxu0
  %v277 = vadd.f32 %v198, %v276
  %v278 = vpop.f32.mrb[0].mxu0
  %279 = vmatprep.mubr.f32.mxu0 0.0
  %280 = vmatmul.mubr.f32.gmra.mrb[0].mxu0 %v63
  %v281 = vpop.f32.mrb[0].mxu0
  %v282 = vadd.f32 %v198, %v281
  %v283 = vpop.f32.mrb[0].mxu0
  %284 = vmatprep.mubr.f32.mxu0 0.0
  %285 = vmatmul.mubr.f32.gmra.mrb[0].mxu0 %v66
  %v286 = vpop.f32.mrb[0].mxu0
  %v287 = vadd.f32 %v198, %v286
  %v288 = vpop.f32.mrb[0].mxu0
  %289 = vmatprep.mubr.f32.mxu0 0.0
  %290 = vmatmul.mubr.f32.gmra.mrb[0].mxu0 %v69
  %v291 = vpop.f32.mrb[0].mxu0
  %v292 = vadd.f32 %v198, %v291
  %v293 = vpop.f32.mrb[0].mxu0
  %294 = vmatprep.mubr.f32.mxu0 0.0
  %295 = vmatmul.mubr.f32.gmra.mrb[0].mxu0 %v72
  %v296 = vpop.f32.mrb[0].mxu0
  %v297 = vadd.f32 %v198, %v296
  %v298 = vpop.f32.mrb[0].mxu0
  %299 = vmatprep.mubr.f32.mxu0 0.0
  %300 = vmatmul.mubr.f32.gmra.mrb[0].mxu0 %v75
  %v301 = vpop.f32.mrb[0].mxu0
  %v302 = vadd.f32 %v198, %v301
  %v303 = vpop.f32.mrb[0].mxu0
  %304 = vdwg.mxu0
  %305 = vst.msk [vmem:[#allocation3] sm:$0xff] %vm182, %v267
  %306 = vst.msk [vmem:[#allocation3 + $0x8] sm:$0xff] %vm182, %v272
  %307 = vst.msk [vmem:[#allocation3 + $0x10] sm:$0xff] %vm182, %v277
  %308 = vst.msk [vmem:[#allocation3 + $0x18] sm:$0xff] %vm182, %v282
  %309 = vst.msk [vmem:[#allocation3 + $0x20] sm:$0xff] %vm182, %v287
  %310 = vst.msk [vmem:[#allocation3 + $0x28] sm:$0xff] %vm182, %v292
  %311 = vst.msk [vmem:[#allocation3 + $0x30] sm:$0xff] %vm182, %v297
  %312 = vst.msk [vmem:[#allocation3 + $0x38] sm:$0xff] %vm182, %v302
  %v313 = vld [vmem:[%s2] sm:$0xff]
  %v314 = vld [vmem:[%s2 + $0x8] sm:$0xff]
  %v315 = vld [vmem:[%s2 + $0x10] sm:$0xff]
  %v316 = vld [vmem:[%s2 + $0x18] sm:$0xff]
  %v317 = vld [vmem:[%s5] sm:$0xff]
  %v318 = vld [vmem:[%s5 + $0x8] sm:$0xff]
  %v319 = vld [vmem:[%s5 + $0x10] sm:$0xff]
  %v320 = vld [vmem:[%s5 + $0x18] sm:$0xff]
  %v321 = vld [vmem:[#allocation2] sm:$0xff]
  %v323 = vsel %vm182, 0.0, 0
  %325 = vmatprep.subr.mxu0 0.0
  %326 = vmatpush1.msra.mxu0 %v313
  %327 = vmatprep.subr.mxu0 0.0
  %328 = vmatpush1.msra.mxu0 %v314
  %329 = vmatprep.subr.mxu0 0.0
  %330 = vmatpush1.msra.mxu0 %v315
  %331 = vmatprep.subr.mxu0 0.0
  %332 = vmatpush1.msra.mxu0 %v316
  %333 = vmatprep.subr.mxu0 0.0
  %334 = vmatpush1.msra.mxu0 0.0
  %335 = vmatprep.subr.mxu0 0.0
  %336 = vmatpush1.msra.mxu0 0.0
  %337 = vmatprep.subr.mxu0 0.0
  %338 = vmatpush1.msra.mxu0 0.0
  %339 = vmatprep.subr.mxu0 0.0
  %340 = vmatpush1.msra.mxu0 0.0
  %341 = vmatprep.subr.mxu0 0.0
  %342 = vmatpush1.msra.mxu0 0.0
  %343 = vmatprep.subr.mxu0 0.0
  %344 = vmatpush1.msra.mxu0 0.0
  %345 = vmatprep.subr.mxu0 0.0
  %346 = vmatpush1.msra.mxu0 0.0
  %347 = vmatprep.subr.mxu0 0.0
  %348 = vmatpush1.msra.mxu0 0.0
  %349 = vmatprep.subr.mxu0 0.0
  %350 = vmatpush1.msra.mxu0 0.0
  %351 = vmatprep.subr.mxu0 0.0
  %352 = vmatpush1.msra.mxu0 0.0
  %353 = vmatprep.subr.mxu0 0.0
  %354 = vmatpush1.msra.mxu0 0.0
  %355 = vmatprep.subr.mxu0 0.0
  %356 = vmatpush1.msra.mxu0 0.0
  %357 = vmatprep.subr.mxu0 0.0
  %358 = vmatpush1.msra.mxu0 0.0
  %359 = vmatprep.subr.mxu0 0.0
  %360 = vmatpush1.msra.mxu0 0.0
  %361 = vmatprep.subr.mxu0 0.0
  %362 = vmatpush1.msra.mxu0 0.0
  %363 = vmatprep.subr.mxu0 0.0
  %364 = vmatpush1.msra.mxu0 0.0
  %365 = vmatprep.subr.mxu0 0.0
  %366 = vmatpush1.msra.mxu0 0.0
  %367 = vmatprep.subr.mxu0 0.0
  %368 = vmatpush1.msra.mxu0 0.0
  %369 = vmatprep.subr.mxu0 0.0
  %370 = vmatpush1.msra.mxu0 0.0
  %371 = vmatprep.subr.mxu0 0.0
  %372 = vmatpush1.msra.mxu0 0.0
  %373 = vmatprep.subr.mxu0 0.0
  %374 = vmatpush1.msra.mxu0 0.0
  %375 = vmatprep.subr.mxu0 0.0
  %376 = vmatpush1.msra.mxu0 0.0
  %377 = vmatprep.subr.mxu0 0.0
  %378 = vmatpush1.msra.mxu0 0.0
  %379 = vmatprep.subr.mxu0 0.0
  %380 = vmatpush1.msra.mxu0 0.0
  %381 = vmatprep.subr.mxu0 0.0
  %382 = vmatpush1.msra.mxu0 0.0
  %383 = vmatprep.subr.mxu0 0.0
  %384 = vmatpush1.msra.mxu0 0.0
  %385 = vmatprep.subr.mxu0 0.0
  %386 = vmatpush1.msra.mxu0 0.0
  %387 = vmatprep.subr.mxu0 0.0
  %388 = vmatpush1.msra.mxu0 0.0
  %389 = vmatprep.mubr.f32.mxu0 0.0
  %390 = vmatmul.mubr.f32.gmra.mrb[0].mxu0 %v323
  %v391 = vpop.f32.mrb[0].mxu0
  %v392 = vadd.f32 0.0, %v391
  %v393 = vpop.f32.mrb[0].mxu0
  %394 = vdwg.mxu0
  %v395 = vadd.f32 %v321, %v392
  %v396 = vtanh.pop %v395
  %s397 = scalar_lea.vmem [#allocation3], 56
  %v398 = vld [vmem:[%s397] sm:$0xff]
  %399 = vmatprep.subr.mxu0 0.0
  %400 = vmatpush1.msra.mxu0 %v317
  %401 = vmatprep.subr.mxu0 0.0
  %402 = vmatpush1.msra.mxu0 %v318
  %403 = vmatprep.subr.mxu0 0.0
  %404 = vmatpush1.msra.mxu0 %v319
  %405 = vmatprep.subr.mxu0 0.0
  %406 = vmatpush1.msra.mxu0 %v320
  %407 = vmatprep.subr.mxu0 0.0
  %408 = vmatpush1.msra.mxu0 0.0
  %409 = vmatprep.subr.mxu0 0.0
  %410 = vmatpush1.msra.mxu0 0.0
  %411 = vmatprep.subr.mxu0 0.0
  %412 = vmatpush1.msra.mxu0 0.0
  %413 = vmatprep.subr.mxu0 0.0
  %414 = vmatpush1.msra.mxu0 0.0
  %415 = vmatprep.subr.mxu0 0.0
  %416 = vmatpush1.msra.mxu0 0.0
  %417 = vmatprep.subr.mxu0 0.0
  %418 = vmatpush1.msra.mxu0 0.0
  %419 = vmatprep.subr.mxu0 0.0
  %420 = vmatpush1.msra.mxu0 0.0
  %421 = vmatprep.subr.mxu0 0.0
  %422 = vmatpush1.msra.mxu0 0.0
  %423 = vmatprep.subr.mxu0 0.0
  %424 = vmatpush1.msra.mxu0 0.0
  %425 = vmatprep.subr.mxu0 0.0
  %426 = vmatpush1.msra.mxu0 0.0
  %427 = vmatprep.subr.mxu0 0.0
  %428 = vmatpush1.msra.mxu0 0.0
  %429 = vmatprep.subr.mxu0 0.0
  %430 = vmatpush1.msra.mxu0 0.0
  %431 = vmatprep.subr.mxu0 0.0
  %432 = vmatpush1.msra.mxu0 0.0
  %433 = vmatprep.subr.mxu0 0.0
  %434 = vmatpush1.msra.mxu0 0.0
  %435 = vmatprep.subr.mxu0 0.0
  %436 = vmatpush1.msra.mxu0 0.0
  %437 = vmatprep.subr.mxu0 0.0
  %438 = vmatpush1.msra.mxu0 0.0
  %439 = vmatprep.subr.mxu0 0.0
  %440 = vmatpush1.msra.mxu0 0.0
  %441 = vmatprep.subr.mxu0 0.0
  %442 = vmatpush1.msra.mxu0 0.0
  %443 = vmatprep.subr.mxu0 0.0
  %444 = vmatpush1.msra.mxu0 0.0
  %445 = vmatprep.subr.mxu0 0.0
  %446 = vmatpush1.msra.mxu0 0.0
  %447 = vmatprep.subr.mxu0 0.0
  %448 = vmatpush1.msra.mxu0 0.0
  %449 = vmatprep.subr.mxu0 0.0
  %450 = vmatpush1.msra.mxu0 0.0
  %451 = vmatprep.subr.mxu0 0.0
  %452 = vmatpush1.msra.mxu0 0.0
  %453 = vmatprep.subr.mxu0 0.0
  %454 = vmatpush1.msra.mxu0 0.0
  %455 = vmatprep.subr.mxu0 0.0
  %456 = vmatpush1.msra.mxu0 0.0
  %457 = vmatprep.subr.mxu0 0.0
  %458 = vmatpush1.msra.mxu0 0.0
  %459 = vmatprep.subr.mxu0 0.0
  %460 = vmatpush1.msra.mxu0 0.0
  %461 = vmatprep.subr.mxu0 0.0
  %462 = vmatpush1.msra.mxu0 0.0
  %463 = vmatprep.mubr.f32.mxu0 0.0
  %464 = vmatmul.mubr.f32.gmra.mrb[0].mxu0 %v323
  %v465 = vpop.f32.mrb[0].mxu0
  %v466 = vadd.f32 0.0, %v465
  %v467 = vpop.f32.mrb[0].mxu0
  %468 = vdwg.mxu0
  %v469 = vadd.f32 %v398, %v466
  %v470 = vtanh.pop %v469
  %s471 = scalar_lea.vmem [#allocation2], 8
  %v472 = vld [vmem:[%s471] sm:$0xff]
  %v474 = vsel %vm182, %v396, 0
  %476 = vmatprep.subr.mxu0 0.0
  %477 = vmatpush1.msra.mxu0 %v313
  %478 = vmatprep.subr.mxu0 0.0
  %479 = vmatpush1.msra.mxu0 %v314
  %480 = vmatprep.subr.mxu0 0.0
  %481 = vmatpush1.msra.mxu0 %v315
  %482 = vmatprep.subr.mxu0 0.0
  %483 = vmatpush1.msra.mxu0 %v316
  %484 = vmatprep.subr.mxu0 0.0
  %485 = vmatpush1.msra.mxu0 0.0
  %486 = vmatprep.subr.mxu0 0.0
  %487 = vmatpush1.msra.mxu0 0.0
  %488 = vmatprep.subr.mxu0 0.0
  %489 = vmatpush1.msra.mxu0 0.0
  %490 = vmatprep.subr.mxu0 0.0
  %491 = vmatpush1.msra.mxu0 0.0
  %492 = vmatprep.subr.mxu0 0.0
  %493 = vmatpush1.msra.mxu0 0.0
  %494 = vmatprep.subr.mxu0 0.0
  %495 = vmatpush1.msra.mxu0 0.0
  %496 = vmatprep.subr.mxu0 0.0
  %497 = vmatpush1.msra.mxu0 0.0
  %498 = vmatprep.subr.mxu0 0.0
  %499 = vmatpush1.msra.mxu0 0.0
  %500 = vmatprep.subr.mxu0 0.0
  %501 = vmatpush1.msra.mxu0 0.0
  %502 = vmatprep.subr.mxu0 0.0
  %503 = vmatpush1.msra.mxu0 0.0
  %504 = vmatprep.subr.mxu0 0.0
  %505 = vmatpush1.msra.mxu0 0.0
  %506 = vmatprep.subr.mxu0 0.0
  %507 = vmatpush1.msra.mxu0 0.0
  %508 = vmatprep.subr.mxu0 0.0
  %509 = vmatpush1.msra.mxu0 0.0
  %510 = vmatprep.subr.mxu0 0.0
  %511 = vmatpush1.msra.mxu0 0.0
  %512 = vmatprep.subr.mxu0 0.0
  %513 = vmatpush1.msra.mxu0 0.0
  %514 = vmatprep.subr.mxu0 0.0
  %515 = vmatpush1.msra.mxu0 0.0
  %516 = vmatprep.subr.mxu0 0.0
  %517 = vmatpush1.msra.mxu0 0.0
  %518 = vmatprep.subr.mxu0 0.0
  %519 = vmatpush1.msra.mxu0 0.0
  %520 = vmatprep.subr.mxu0 0.0
  %521 = vmatpush1.msra.mxu0 0.0
  %522 = vmatprep.subr.mxu0 0.0
  %523 = vmatpush1.msra.mxu0 0.0
  %524 = vmatprep.subr.mxu0 0.0
  %525 = vmatpush1.msra.mxu0 0.0
  %526 = vmatprep.subr.mxu0 0.0
  %527 = vmatpush1.msra.mxu0 0.0
  %528 = vmatprep.subr.mxu0 0.0
  %529 = vmatpush1.msra.mxu0 0.0
  %530 = vmatprep.subr.mxu0 0.0
  %531 = vmatpush1.msra.mxu0 0.0
  %532 = vmatprep.subr.mxu0 0.0
  %533 = vmatpush1.msra.mxu0 0.0
  %534 = vmatprep.subr.mxu0 0.0
  %535 = vmatpush1.msra.mxu0 0.0
  %536 = vmatprep.subr.mxu0 0.0
  %537 = vmatpush1.msra.mxu0 0.0
  %538 = vmatprep.subr.mxu0 0.0
  %539 = vmatpush1.msra.mxu0 0.0
  %540 = vmatprep.mubr.f32.mxu0 0.0
  %541 = vmatmul.mubr.f32.gmra.mrb[0].mxu0 %v474
  %v542 = vpop.f32.mrb[0].mxu0
  %v543 = vadd.f32 0.0, %v542
  %v544 = vpop.f32.mrb[0].mxu0
  %545 = vdwg.mxu0
  %v546 = vadd.f32 %v472, %v543
  %v547 = vtanh.pop %v546
  %s548 = scalar_lea.vmem [#allocation3], 48
  %v549 = vld [vmem:[%s548] sm:$0xff]
  %v551 = vsel %vm182, %v470, 0
  %553 = vmatprep.subr.mxu0 0.0
  %554 = vmatpush1.msra.mxu0 %v317
  %555 = vmatprep.subr.mxu0 0.0
  %556 = vmatpush1.msra.mxu0 %v318
  %557 = vmatprep.subr.mxu0 0.0
  %558 = vmatpush1.msra.mxu0 %v319
  %559 = vmatprep.subr.mxu0 0.0
  %560 = vmatpush1.msra.mxu0 %v320
  %561 = vmatprep.subr.mxu0 0.0
  %562 = vmatpush1.msra.mxu0 0.0
  %563 = vmatprep.subr.mxu0 0.0
  %564 = vmatpush1.msra.mxu0 0.0
  %565 = vmatprep.subr.mxu0 0.0
  %566 = vmatpush1.msra.mxu0 0.0
  %567 = vmatprep.subr.mxu0 0.0
  %568 = vmatpush1.msra.mxu0 0.0
  %569 = vmatprep.subr.mxu0 0.0
  %570 = vmatpush1.msra.mxu0 0.0
  %571 = vmatprep.subr.mxu0 0.0
  %572 = vmatpush1.msra.mxu0 0.0
  %573 = vmatprep.subr.mxu0 0.0
  %574 = vmatpush1.msra.mxu0 0.0
  %575 = vmatprep.subr.mxu0 0.0
  %576 = vmatpush1.msra.mxu0 0.0
  %577 = vmatprep.subr.mxu0 0.0
  %578 = vmatpush1.msra.mxu0 0.0
  %579 = vmatprep.subr.mxu0 0.0
  %580 = vmatpush1.msra.mxu0 0.0
  %581 = vmatprep.subr.mxu0 0.0
  %582 = vmatpush1.msra.mxu0 0.0
  %583 = vmatprep.subr.mxu0 0.0
  %584 = vmatpush1.msra.mxu0 0.0
  %585 = vmatprep.subr.mxu0 0.0
  %586 = vmatpush1.msra.mxu0 0.0
  %587 = vmatprep.subr.mxu0 0.0
  %588 = vmatpush1.msra.mxu0 0.0
  %589 = vmatprep.subr.mxu0 0.0
  %590 = vmatpush1.msra.mxu0 0.0
  %591 = vmatprep.subr.mxu0 0.0
  %592 = vmatpush1.msra.mxu0 0.0
  %593 = vmatprep.subr.mxu0 0.0
  %594 = vmatpush1.msra.mxu0 0.0
  %595 = vmatprep.subr.mxu0 0.0
  %596 = vmatpush1.msra.mxu0 0.0
  %597 = vmatprep.subr.mxu0 0.0
  %598 = vmatpush1.msra.mxu0 0.0
  %599 = vmatprep.subr.mxu0 0.0
  %600 = vmatpush1.msra.mxu0 0.0
  %601 = vmatprep.subr.mxu0 0.0
  %602 = vmatpush1.msra.mxu0 0.0
  %603 = vmatprep.subr.mxu0 0.0
  %604 = vmatpush1.msra.mxu0 0.0
  %605 = vmatprep.subr.mxu0 0.0
  %606 = vmatpush1.msra.mxu0 0.0
  %607 = vmatprep.subr.mxu0 0.0
  %608 = vmatpush1.msra.mxu0 0.0
  %609 = vmatprep.subr.mxu0 0.0
  %610 = vmatpush1.msra.mxu0 0.0
  %611 = vmatprep.subr.mxu0 0.0
  %612 = vmatpush1.msra.mxu0 0.0
  %613 = vmatprep.subr.mxu0 0.0
  %614 = vmatpush1.msra.mxu0 0.0
  %615 = vmatprep.subr.mxu0 0.0
  %616 = vmatpush1.msra.mxu0 0.0
  %617 = vmatprep.mubr.f32.mxu0 0.0
  %618 = vmatmul.mubr.f32.gmra.mrb[0].mxu0 %v551
  %v619 = vpop.f32.mrb[0].mxu0
  %v620 = vadd.f32 0.0, %v619
  %v621 = vpop.f32.mrb[0].mxu0
  %622 = vdwg.mxu0
  %v623 = vadd.f32 %v549, %v620
  %v624 = vtanh.pop %v623
  %s625 = scalar_lea.vmem [#allocation2], 16
  %v626 = vld [vmem:[%s625] sm:$0xff]
  %v628 = vsel %vm182, %v547, 0
  %630 = vmatprep.subr.mxu0 0.0
  %631 = vmatpush1.msra.mxu0 %v313
  %632 = vmatprep.subr.mxu0 0.0
  %633 = vmatpush1.msra.mxu0 %v314
  %634 = vmatprep.subr.mxu0 0.0
  %635 = vmatpush1.msra.mxu0 %v315
  %636 = vmatprep.subr.mxu0 0.0
  %637 = vmatpush1.msra.mxu0 %v316
  %638 = vmatprep.subr.mxu0 0.0
  %639 = vmatpush1.msra.mxu0 0.0
  %640 = vmatprep.subr.mxu0 0.0
  %641 = vmatpush1.msra.mxu0 0.0
  %642 = vmatprep.subr.mxu0 0.0
  %643 = vmatpush1.msra.mxu0 0.0
  %644 = vmatprep.subr.mxu0 0.0
  %645 = vmatpush1.msra.mxu0 0.0
  %646 = vmatprep.subr.mxu0 0.0
  %647 = vmatpush1.msra.mxu0 0.0
  %648 = vmatprep.subr.mxu0 0.0
  %649 = vmatpush1.msra.mxu0 0.0
  %650 = vmatprep.subr.mxu0 0.0
  %651 = vmatpush1.msra.mxu0 0.0
  %652 = vmatprep.subr.mxu0 0.0
  %653 = vmatpush1.msra.mxu0 0.0
  %654 = vmatprep.subr.mxu0 0.0
  %655 = vmatpush1.msra.mxu0 0.0
  %656 = vmatprep.subr.mxu0 0.0
  %657 = vmatpush1.msra.mxu0 0.0
  %658 = vmatprep.subr.mxu0 0.0
  %659 = vmatpush1.msra.mxu0 0.0
  %660 = vmatprep.subr.mxu0 0.0
  %661 = vmatpush1.msra.mxu0 0.0
  %662 = vmatprep.subr.mxu0 0.0
  %663 = vmatpush1.msra.mxu0 0.0
  %664 = vmatprep.subr.mxu0 0.0
  %665 = vmatpush1.msra.mxu0 0.0
  %666 = vmatprep.subr.mxu0 0.0
  %667 = vmatpush1.msra.mxu0 0.0
  %668 = vmatprep.subr.mxu0 0.0
  %669 = vmatpush1.msra.mxu0 0.0
  %670 = vmatprep.subr.mxu0 0.0
  %671 = vmatpush1.msra.mxu0 0.0
  %672 = vmatprep.subr.mxu0 0.0
  %673 = vmatpush1.msra.mxu0 0.0
  %674 = vmatprep.subr.mxu0 0.0
  %675 = vmatpush1.msra.mxu0 0.0
  %676 = vmatprep.subr.mxu0 0.0
  %677 = vmatpush1.msra.mxu0 0.0
  %678 = vmatprep.subr.mxu0 0.0
  %679 = vmatpush1.msra.mxu0 0.0
  %680 = vmatprep.subr.mxu0 0.0
  %681 = vmatpush1.msra.mxu0 0.0
  %682 = vmatprep.subr.mxu0 0.0
  %683 = vmatpush1.msra.mxu0 0.0
  %684 = vmatprep.subr.mxu0 0.0
  %685 = vmatpush1.msra.mxu0 0.0
  %686 = vmatprep.subr.mxu0 0.0
  %687 = vmatpush1.msra.mxu0 0.0
  %688 = vmatprep.subr.mxu0 0.0
  %689 = vmatpush1.msra.mxu0 0.0
  %690 = vmatprep.subr.mxu0 0.0
  %691 = vmatpush1.msra.mxu0 0.0
  %692 = vmatprep.subr.mxu0 0.0
  %693 = vmatpush1.msra.mxu0 0.0
  %694 = vmatprep.mubr.f32.mxu0 0.0
  %695 = vmatmul.mubr.f32.gmra.mrb[0].mxu0 %v628
  %v696 = vpop.f32.mrb[0].mxu0
  %v697 = vadd.f32 0.0, %v696
  %v698 = vpop.f32.mrb[0].mxu0
  %699 = vdwg.mxu0
  %v700 = vadd.f32 %v626, %v697
  %v701 = vtanh.pop %v700
  %s702 = scalar_lea.vmem [#allocation3], 40
  %v703 = vld [vmem:[%s702] sm:$0xff]
  %v705 = vsel %vm182, %v624, 0
  %707 = vmatprep.subr.mxu0 0.0
  %708 = vmatpush1.msra.mxu0 %v317
  %709 = vmatprep.subr.mxu0 0.0
  %710 = vmatpush1.msra.mxu0 %v318
  %711 = vmatprep.subr.mxu0 0.0
  %712 = vmatpush1.msra.mxu0 %v319
  %713 = vmatprep.subr.mxu0 0.0
  %714 = vmatpush1.msra.mxu0 %v320
  %715 = vmatprep.subr.mxu0 0.0
  %716 = vmatpush1.msra.mxu0 0.0
  %717 = vmatprep.subr.mxu0 0.0
  %718 = vmatpush1.msra.mxu0 0.0
  %719 = vmatprep.subr.mxu0 0.0
  %720 = vmatpush1.msra.mxu0 0.0
  %721 = vmatprep.subr.mxu0 0.0
  %722 = vmatpush1.msra.mxu0 0.0
  %723 = vmatprep.subr.mxu0 0.0
  %724 = vmatpush1.msra.mxu0 0.0
  %725 = vmatprep.subr.mxu0 0.0
  %726 = vmatpush1.msra.mxu0 0.0
  %727 = vmatprep.subr.mxu0 0.0
  %728 = vmatpush1.msra.mxu0 0.0
  %729 = vmatprep.subr.mxu0 0.0
  %730 = vmatpush1.msra.mxu0 0.0
  %731 = vmatprep.subr.mxu0 0.0
  %732 = vmatpush1.msra.mxu0 0.0
  %733 = vmatprep.subr.mxu0 0.0
  %734 = vmatpush1.msra.mxu0 0.0
  %735 = vmatprep.subr.mxu0 0.0
  %736 = vmatpush1.msra.mxu0 0.0
  %737 = vmatprep.subr.mxu0 0.0
  %738 = vmatpush1.msra.mxu0 0.0
  %739 = vmatprep.subr.mxu0 0.0
  %740 = vmatpush1.msra.mxu0 0.0
  %741 = vmatprep.subr.mxu0 0.0
  %742 = vmatpush1.msra.mxu0 0.0
  %743 = vmatprep.subr.mxu0 0.0
  %744 = vmatpush1.msra.mxu0 0.0
  %745 = vmatprep.subr.mxu0 0.0
  %746 = vmatpush1.msra.mxu0 0.0
  %747 = vmatprep.subr.mxu0 0.0
  %748 = vmatpush1.msra.mxu0 0.0
  %749 = vmatprep.subr.mxu0 0.0
  %750 = vmatpush1.msra.mxu0 0.0
  %751 = vmatprep.subr.mxu0 0.0
  %752 = vmatpush1.msra.mxu0 0.0
  %753 = vmatprep.subr.mxu0 0.0
  %754 = vmatpush1.msra.mxu0 0.0
  %755 = vmatprep.subr.mxu0 0.0
  %756 = vmatpush1.msra.mxu0 0.0
  %757 = vmatprep.subr.mxu0 0.0
  %758 = vmatpush1.msra.mxu0 0.0
  %759 = vmatprep.subr.mxu0 0.0
  %760 = vmatpush1.msra.mxu0 0.0
  %761 = vmatprep.subr.mxu0 0.0
  %762 = vmatpush1.msra.mxu0 0.0
  %763 = vmatprep.subr.mxu0 0.0
  %764 = vmatpush1.msra.mxu0 0.0
  %765 = vmatprep.subr.mxu0 0.0
  %766 = vmatpush1.msra.mxu0 0.0
  %767 = vmatprep.subr.mxu0 0.0
  %768 = vmatpush1.msra.mxu0 0.0
  %769 = vmatprep.subr.mxu0 0.0
  %770 = vmatpush1.msra.mxu0 0.0
  %771 = vmatprep.mubr.f32.mxu0 0.0
  %772 = vmatmul.mubr.f32.gmra.mrb[0].mxu0 %v705
  %v773 = vpop.f32.mrb[0].mxu0
  %v774 = vadd.f32 0.0, %v773
  %v775 = vpop.f32.mrb[0].mxu0
  %776 = vdwg.mxu0
  %v777 = vadd.f32 %v703, %v774
  %v778 = vtanh.pop %v777
  %s779 = scalar_lea.vmem [#allocation2], 24
  %v780 = vld [vmem:[%s779] sm:$0xff]
  %v782 = vsel %vm182, %v701, 0
  %784 = vmatprep.subr.mxu0 0.0
  %785 = vmatpush1.msra.mxu0 %v313
  %786 = vmatprep.subr.mxu0 0.0
  %787 = vmatpush1.msra.mxu0 %v314
  %788 = vmatprep.subr.mxu0 0.0
  %789 = vmatpush1.msra.mxu0 %v315
  %790 = vmatprep.subr.mxu0 0.0
  %791 = vmatpush1.msra.mxu0 %v316
  %792 = vmatprep.subr.mxu0 0.0
  %793 = vmatpush1.msra.mxu0 0.0
  %794 = vmatprep.subr.mxu0 0.0
  %795 = vmatpush1.msra.mxu0 0.0
  %796 = vmatprep.subr.mxu0 0.0
  %797 = vmatpush1.msra.mxu0 0.0
  %798 = vmatprep.subr.mxu0 0.0
  %799 = vmatpush1.msra.mxu0 0.0
  %800 = vmatprep.subr.mxu0 0.0
  %801 = vmatpush1.msra.mxu0 0.0
  %802 = vmatprep.subr.mxu0 0.0
  %803 = vmatpush1.msra.mxu0 0.0
  %804 = vmatprep.subr.mxu0 0.0
  %805 = vmatpush1.msra.mxu0 0.0
  %806 = vmatprep.subr.mxu0 0.0
  %807 = vmatpush1.msra.mxu0 0.0
  %808 = vmatprep.subr.mxu0 0.0
  %809 = vmatpush1.msra.mxu0 0.0
  %810 = vmatprep.subr.mxu0 0.0
  %811 = vmatpush1.msra.mxu0 0.0
  %812 = vmatprep.subr.mxu0 0.0
  %813 = vmatpush1.msra.mxu0 0.0
  %814 = vmatprep.subr.mxu0 0.0
  %815 = vmatpush1.msra.mxu0 0.0
  %816 = vmatprep.subr.mxu0 0.0
  %817 = vmatpush1.msra.mxu0 0.0
  %818 = vmatprep.subr.mxu0 0.0
  %819 = vmatpush1.msra.mxu0 0.0
  %820 = vmatprep.subr.mxu0 0.0
  %821 = vmatpush1.msra.mxu0 0.0
  %822 = vmatprep.subr.mxu0 0.0
  %823 = vmatpush1.msra.mxu0 0.0
  %824 = vmatprep.subr.mxu0 0.0
  %825 = vmatpush1.msra.mxu0 0.0
  %826 = vmatprep.subr.mxu0 0.0
  %827 = vmatpush1.msra.mxu0 0.0
  %828 = vmatprep.subr.mxu0 0.0
  %829 = vmatpush1.msra.mxu0 0.0
  %830 = vmatprep.subr.mxu0 0.0
  %831 = vmatpush1.msra.mxu0 0.0
  %832 = vmatprep.subr.mxu0 0.0
  %833 = vmatpush1.msra.mxu0 0.0
  %834 = vmatprep.subr.mxu0 0.0
  %835 = vmatpush1.msra.mxu0 0.0
  %836 = vmatprep.subr.mxu0 0.0
  %837 = vmatpush1.msra.mxu0 0.0
  %838 = vmatprep.subr.mxu0 0.0
  %839 = vmatpush1.msra.mxu0 0.0
  %840 = vmatprep.subr.mxu0 0.0
  %841 = vmatpush1.msra.mxu0 0.0
  %842 = vmatprep.subr.mxu0 0.0
  %843 = vmatpush1.msra.mxu0 0.0
  %844 = vmatprep.subr.mxu0 0.0
  %845 = vmatpush1.msra.mxu0 0.0
  %846 = vmatprep.subr.mxu0 0.0
  %847 = vmatpush1.msra.mxu0 0.0
  %848 = vmatprep.mubr.f32.mxu0 0.0
  %849 = vmatmul.mubr.f32.gmra.mrb[0].mxu0 %v782
  %v850 = vpop.f32.mrb[0].mxu0
  %v851 = vadd.f32 0.0, %v850
  %v852 = vpop.f32.mrb[0].mxu0
  %853 = vdwg.mxu0
  %v854 = vadd.f32 %v780, %v851
  %v855 = vtanh.pop %v854
  %s856 = scalar_lea.vmem [#allocation3], 32
  %v857 = vld [vmem:[%s856] sm:$0xff]
  %v859 = vsel %vm182, %v778, 0
  %861 = vmatprep.subr.mxu0 0.0
  %862 = vmatpush1.msra.mxu0 %v317
  %863 = vmatprep.subr.mxu0 0.0
  %864 = vmatpush1.msra.mxu0 %v318
  %865 = vmatprep.subr.mxu0 0.0
  %866 = vmatpush1.msra.mxu0 %v319
  %867 = vmatprep.subr.mxu0 0.0
  %868 = vmatpush1.msra.mxu0 %v320
  %869 = vmatprep.subr.mxu0 0.0
  %870 = vmatpush1.msra.mxu0 0.0
  %871 = vmatprep.subr.mxu0 0.0
  %872 = vmatpush1.msra.mxu0 0.0
  %873 = vmatprep.subr.mxu0 0.0
  %874 = vmatpush1.msra.mxu0 0.0
  %875 = vmatprep.subr.mxu0 0.0
  %876 = vmatpush1.msra.mxu0 0.0
  %877 = vmatprep.subr.mxu0 0.0
  %878 = vmatpush1.msra.mxu0 0.0
  %879 = vmatprep.subr.mxu0 0.0
  %880 = vmatpush1.msra.mxu0 0.0
  %881 = vmatprep.subr.mxu0 0.0
  %882 = vmatpush1.msra.mxu0 0.0
  %883 = vmatprep.subr.mxu0 0.0
  %884 = vmatpush1.msra.mxu0 0.0
  %885 = vmatprep.subr.mxu0 0.0
  %886 = vmatpush1.msra.mxu0 0.0
  %887 = vmatprep.subr.mxu0 0.0
  %888 = vmatpush1.msra.mxu0 0.0
  %889 = vmatprep.subr.mxu0 0.0
  %890 = vmatpush1.msra.mxu0 0.0
  %891 = vmatprep.subr.mxu0 0.0
  %892 = vmatpush1.msra.mxu0 0.0
  %893 = vmatprep.subr.mxu0 0.0
  %894 = vmatpush1.msra.mxu0 0.0
  %895 = vmatprep.subr.mxu0 0.0
  %896 = vmatpush1.msra.mxu0 0.0
  %897 = vmatprep.subr.mxu0 0.0
  %898 = vmatpush1.msra.mxu0 0.0
  %899 = vmatprep.subr.mxu0 0.0
  %900 = vmatpush1.msra.mxu0 0.0
  %901 = vmatprep.subr.mxu0 0.0
  %902 = vmatpush1.msra.mxu0 0.0
  %903 = vmatprep.subr.mxu0 0.0
  %904 = vmatpush1.msra.mxu0 0.0
  %905 = vmatprep.subr.mxu0 0.0
  %906 = vmatpush1.msra.mxu0 0.0
  %907 = vmatprep.subr.mxu0 0.0
  %908 = vmatpush1.msra.mxu0 0.0
  %909 = vmatprep.subr.mxu0 0.0
  %910 = vmatpush1.msra.mxu0 0.0
  %911 = vmatprep.subr.mxu0 0.0
  %912 = vmatpush1.msra.mxu0 0.0
  %913 = vmatprep.subr.mxu0 0.0
  %914 = vmatpush1.msra.mxu0 0.0
  %915 = vmatprep.subr.mxu0 0.0
  %916 = vmatpush1.msra.mxu0 0.0
  %917 = vmatprep.subr.mxu0 0.0
  %918 = vmatpush1.msra.mxu0 0.0
  %919 = vmatprep.subr.mxu0 0.0
  %920 = vmatpush1.msra.mxu0 0.0
  %921 = vmatprep.subr.mxu0 0.0
  %922 = vmatpush1.msra.mxu0 0.0
  %923 = vmatprep.subr.mxu0 0.0
  %924 = vmatpush1.msra.mxu0 0.0
  %925 = vmatprep.mubr.f32.mxu0 0.0
  %926 = vmatmul.mubr.f32.gmra.mrb[0].mxu0 %v859
  %v927 = vpop.f32.mrb[0].mxu0
  %v928 = vadd.f32 0.0, %v927
  %v929 = vpop.f32.mrb[0].mxu0
  %930 = vdwg.mxu0
  %v931 = vadd.f32 %v857, %v928
  %v932 = vtanh.pop %v931
  %s933 = scalar_lea.vmem [#allocation2], 32
  %v934 = vld [vmem:[%s933] sm:$0xff]
  %v936 = vsel %vm182, %v855, 0
  %938 = vmatprep.subr.mxu0 0.0
  %939 = vmatpush1.msra.mxu0 %v313
  %940 = vmatprep.subr.mxu0 0.0
  %941 = vmatpush1.msra.mxu0 %v314
  %942 = vmatprep.subr.mxu0 0.0
  %943 = vmatpush1.msra.mxu0 %v315
  %944 = vmatprep.subr.mxu0 0.0
  %945 = vmatpush1.msra.mxu0 %v316
  %946 = vmatprep.subr.mxu0 0.0
  %947 = vmatpush1.msra.mxu0 0.0
  %948 = vmatprep.subr.mxu0 0.0
  %949 = vmatpush1.msra.mxu0 0.0
  %950 = vmatprep.subr.mxu0 0.0
  %951 = vmatpush1.msra.mxu0 0.0
  %952 = vmatprep.subr.mxu0 0.0
  %953 = vmatpush1.msra.mxu0 0.0
  %954 = vmatprep.subr.mxu0 0.0
  %955 = vmatpush1.msra.mxu0 0.0
  %956 = vmatprep.subr.mxu0 0.0
  %957 = vmatpush1.msra.mxu0 0.0
  %958 = vmatprep.subr.mxu0 0.0
  %959 = vmatpush1.msra.mxu0 0.0
  %960 = vmatprep.subr.mxu0 0.0
  %961 = vmatpush1.msra.mxu0 0.0
  %962 = vmatprep.subr.mxu0 0.0
  %963 = vmatpush1.msra.mxu0 0.0
  %964 = vmatprep.subr.mxu0 0.0
  %965 = vmatpush1.msra.mxu0 0.0
  %966 = vmatprep.subr.mxu0 0.0
  %967 = vmatpush1.msra.mxu0 0.0
  %968 = vmatprep.subr.mxu0 0.0
  %969 = vmatpush1.msra.mxu0 0.0
  %970 = vmatprep.subr.mxu0 0.0
  %971 = vmatpush1.msra.mxu0 0.0
  %972 = vmatprep.subr.mxu0 0.0
  %973 = vmatpush1.msra.mxu0 0.0
  %974 = vmatprep.subr.mxu0 0.0
  %975 = vmatpush1.msra.mxu0 0.0
  %976 = vmatprep.subr.mxu0 0.0
  %977 = vmatpush1.msra.mxu0 0.0
  %978 = vmatprep.subr.mxu0 0.0
  %979 = vmatpush1.msra.mxu0 0.0
  %980 = vmatprep.subr.mxu0 0.0
  %981 = vmatpush1.msra.mxu0 0.0
  %982 = vmatprep.subr.mxu0 0.0
  %983 = vmatpush1.msra.mxu0 0.0
  %984 = vmatprep.subr.mxu0 0.0
  %985 = vmatpush1.msra.mxu0 0.0
  %986 = vmatprep.subr.mxu0 0.0
  %987 = vmatpush1.msra.mxu0 0.0
  %988 = vmatprep.subr.mxu0 0.0
  %989 = vmatpush1.msra.mxu0 0.0
  %990 = vmatprep.subr.mxu0 0.0
  %991 = vmatpush1.msra.mxu0 0.0
  %992 = vmatprep.subr.mxu0 0.0
  %993 = vmatpush1.msra.mxu0 0.0
  %994 = vmatprep.subr.mxu0 0.0
  %995 = vmatpush1.msra.mxu0 0.0
  %996 = vmatprep.subr.mxu0 0.0
  %997 = vmatpush1.msra.mxu0 0.0
  %998 = vmatprep.subr.mxu0 0.0
  %999 = vmatpush1.msra.mxu0 0.0
  %1000 = vmatprep.subr.mxu0 0.0
  %1001 = vmatpush1.msra.mxu0 0.0
  %1002 = vmatprep.mubr.f32.mxu0 0.0
  %1003 = vmatmul.mubr.f32.gmra.mrb[0].mxu0 %v936
  %v1004 = vpop.f32.mrb[0].mxu0
  %v1005 = vadd.f32 0.0, %v1004
  %v1006 = vpop.f32.mrb[0].mxu0
  %1007 = vdwg.mxu0
  %v1008 = vadd.f32 %v934, %v1005
  %v1009 = vtanh.pop %v1008
  %s1010 = scalar_lea.vmem [#allocation3], 24
  %v1011 = vld [vmem:[%s1010] sm:$0xff]
  %v1013 = vsel %vm182, %v932, 0
  %1015 = vmatprep.subr.mxu0 0.0
  %1016 = vmatpush1.msra.mxu0 %v317
  %1017 = vmatprep.subr.mxu0 0.0
  %1018 = vmatpush1.msra.mxu0 %v318
  %1019 = vmatprep.subr.mxu0 0.0
  %1020 = vmatpush1.msra.mxu0 %v319
  %1021 = vmatprep.subr.mxu0 0.0
  %1022 = vmatpush1.msra.mxu0 %v320
  %1023 = vmatprep.subr.mxu0 0.0
  %1024 = vmatpush1.msra.mxu0 0.0
  %1025 = vmatprep.subr.mxu0 0.0
  %1026 = vmatpush1.msra.mxu0 0.0
  %1027 = vmatprep.subr.mxu0 0.0
  %1028 = vmatpush1.msra.mxu0 0.0
  %1029 = vmatprep.subr.mxu0 0.0
  %1030 = vmatpush1.msra.mxu0 0.0
  %1031 = vmatprep.subr.mxu0 0.0
  %1032 = vmatpush1.msra.mxu0 0.0
  %1033 = vmatprep.subr.mxu0 0.0
  %1034 = vmatpush1.msra.mxu0 0.0
  %1035 = vmatprep.subr.mxu0 0.0
  %1036 = vmatpush1.msra.mxu0 0.0
  %1037 = vmatprep.subr.mxu0 0.0
  %1038 = vmatpush1.msra.mxu0 0.0
  %1039 = vmatprep.subr.mxu0 0.0
  %1040 = vmatpush1.msra.mxu0 0.0
  %1041 = vmatprep.subr.mxu0 0.0
  %1042 = vmatpush1.msra.mxu0 0.0
  %1043 = vmatprep.subr.mxu0 0.0
  %1044 = vmatpush1.msra.mxu0 0.0
  %1045 = vmatprep.subr.mxu0 0.0
  %1046 = vmatpush1.msra.mxu0 0.0
  %1047 = vmatprep.subr.mxu0 0.0
  %1048 = vmatpush1.msra.mxu0 0.0
  %1049 = vmatprep.subr.mxu0 0.0
  %1050 = vmatpush1.msra.mxu0 0.0
  %1051 = vmatprep.subr.mxu0 0.0
  %1052 = vmatpush1.msra.mxu0 0.0
  %1053 = vmatprep.subr.mxu0 0.0
  %1054 = vmatpush1.msra.mxu0 0.0
  %1055 = vmatprep.subr.mxu0 0.0
  %1056 = vmatpush1.msra.mxu0 0.0
  %1057 = vmatprep.subr.mxu0 0.0
  %1058 = vmatpush1.msra.mxu0 0.0
  %1059 = vmatprep.subr.mxu0 0.0
  %1060 = vmatpush1.msra.mxu0 0.0
  %1061 = vmatprep.subr.mxu0 0.0
  %1062 = vmatpush1.msra.mxu0 0.0
  %1063 = vmatprep.subr.mxu0 0.0
  %1064 = vmatpush1.msra.mxu0 0.0
  %1065 = vmatprep.subr.mxu0 0.0
  %1066 = vmatpush1.msra.mxu0 0.0
  %1067 = vmatprep.subr.mxu0 0.0
  %1068 = vmatpush1.msra.mxu0 0.0
  %1069 = vmatprep.subr.mxu0 0.0
  %1070 = vmatpush1.msra.mxu0 0.0
  %1071 = vmatprep.subr.mxu0 0.0
  %1072 = vmatpush1.msra.mxu0 0.0
  %1073 = vmatprep.subr.mxu0 0.0
  %1074 = vmatpush1.msra.mxu0 0.0
  %1075 = vmatprep.subr.mxu0 0.0
  %1076 = vmatpush1.msra.mxu0 0.0
  %1077 = vmatprep.subr.mxu0 0.0
  %1078 = vmatpush1.msra.mxu0 0.0
  %1079 = vmatprep.mubr.f32.mxu0 0.0
  %1080 = vmatmul.mubr.f32.gmra.mrb[0].mxu0 %v1013
  %v1081 = vpop.f32.mrb[0].mxu0
  %v1082 = vadd.f32 0.0, %v1081
  %v1083 = vpop.f32.mrb[0].mxu0
  %1084 = vdwg.mxu0
  %v1085 = vadd.f32 %v1011, %v1082
  %v1086 = vtanh.pop %v1085
  %s1087 = scalar_lea.vmem [#allocation2], 40
  %v1088 = vld [vmem:[%s1087] sm:$0xff]
  %v1090 = vsel %vm182, %v1009, 0
  %1092 = vmatprep.subr.mxu0 0.0
  %1093 = vmatpush1.msra.mxu0 %v313
  %1094 = vmatprep.subr.mxu0 0.0
  %1095 = vmatpush1.msra.mxu0 %v314
  %1096 = vmatprep.subr.mxu0 0.0
  %1097 = vmatpush1.msra.mxu0 %v315
  %1098 = vmatprep.subr.mxu0 0.0
  %1099 = vmatpush1.msra.mxu0 %v316
  %1100 = vmatprep.subr.mxu0 0.0
  %1101 = vmatpush1.msra.mxu0 0.0
  %1102 = vmatprep.subr.mxu0 0.0
  %1103 = vmatpush1.msra.mxu0 0.0
  %1104 = vmatprep.subr.mxu0 0.0
  %1105 = vmatpush1.msra.mxu0 0.0
  %1106 = vmatprep.subr.mxu0 0.0
  %1107 = vmatpush1.msra.mxu0 0.0
  %1108 = vmatprep.subr.mxu0 0.0
  %1109 = vmatpush1.msra.mxu0 0.0
  %1110 = vmatprep.subr.mxu0 0.0
  %1111 = vmatpush1.msra.mxu0 0.0
  %1112 = vmatprep.subr.mxu0 0.0
  %1113 = vmatpush1.msra.mxu0 0.0
  %1114 = vmatprep.subr.mxu0 0.0
  %1115 = vmatpush1.msra.mxu0 0.0
  %1116 = vmatprep.subr.mxu0 0.0
  %1117 = vmatpush1.msra.mxu0 0.0
  %1118 = vmatprep.subr.mxu0 0.0
  %1119 = vmatpush1.msra.mxu0 0.0
  %1120 = vmatprep.subr.mxu0 0.0
  %1121 = vmatpush1.msra.mxu0 0.0
  %1122 = vmatprep.subr.mxu0 0.0
  %1123 = vmatpush1.msra.mxu0 0.0
  %1124 = vmatprep.subr.mxu0 0.0
  %1125 = vmatpush1.msra.mxu0 0.0
  %1126 = vmatprep.subr.mxu0 0.0
  %1127 = vmatpush1.msra.mxu0 0.0
  %1128 = vmatprep.subr.mxu0 0.0
  %1129 = vmatpush1.msra.mxu0 0.0
  %1130 = vmatprep.subr.mxu0 0.0
  %1131 = vmatpush1.msra.mxu0 0.0
  %1132 = vmatprep.subr.mxu0 0.0
  %1133 = vmatpush1.msra.mxu0 0.0
  %1134 = vmatprep.subr.mxu0 0.0
  %1135 = vmatpush1.msra.mxu0 0.0
  %1136 = vmatprep.subr.mxu0 0.0
  %1137 = vmatpush1.msra.mxu0 0.0
  %1138 = vmatprep.subr.mxu0 0.0
  %1139 = vmatpush1.msra.mxu0 0.0
  %1140 = vmatprep.subr.mxu0 0.0
  %1141 = vmatpush1.msra.mxu0 0.0
  %1142 = vmatprep.subr.mxu0 0.0
  %1143 = vmatpush1.msra.mxu0 0.0
  %1144 = vmatprep.subr.mxu0 0.0
  %1145 = vmatpush1.msra.mxu0 0.0
  %1146 = vmatprep.subr.mxu0 0.0
  %1147 = vmatpush1.msra.mxu0 0.0
  %1148 = vmatprep.subr.mxu0 0.0
  %1149 = vmatpush1.msra.mxu0 0.0
  %1150 = vmatprep.subr.mxu0 0.0
  %1151 = vmatpush1.msra.mxu0 0.0
  %1152 = vmatprep.subr.mxu0 0.0
  %1153 = vmatpush1.msra.mxu0 0.0
  %1154 = vmatprep.subr.mxu0 0.0
  %1155 = vmatpush1.msra.mxu0 0.0
  %1156 = vmatprep.mubr.f32.mxu0 0.0
  %1157 = vmatmul.mubr.f32.gmra.mrb[0].mxu0 %v1090
  %v1158 = vpop.f32.mrb[0].mxu0
  %v1159 = vadd.f32 0.0, %v1158
  %v1160 = vpop.f32.mrb[0].mxu0
  %1161 = vdwg.mxu0
  %v1162 = vadd.f32 %v1088, %v1159
  %v1163 = vtanh.pop %v1162
  %s1164 = scalar_lea.vmem [#allocation3], 16
  %v1165 = vld [vmem:[%s1164] sm:$0xff]
  %v1167 = vsel %vm182, %v1086, 0
  %1169 = vmatprep.subr.mxu0 0.0
  %1170 = vmatpush1.msra.mxu0 %v317
  %1171 = vmatprep.subr.mxu0 0.0
  %1172 = vmatpush1.msra.mxu0 %v318
  %1173 = vmatprep.subr.mxu0 0.0
  %1174 = vmatpush1.msra.mxu0 %v319
  %1175 = vmatprep.subr.mxu0 0.0
  %1176 = vmatpush1.msra.mxu0 %v320
  %1177 = vmatprep.subr.mxu0 0.0
  %1178 = vmatpush1.msra.mxu0 0.0
  %1179 = vmatprep.subr.mxu0 0.0
  %1180 = vmatpush1.msra.mxu0 0.0
  %1181 = vmatprep.subr.mxu0 0.0
  %1182 = vmatpush1.msra.mxu0 0.0
  %1183 = vmatprep.subr.mxu0 0.0
  %1184 = vmatpush1.msra.mxu0 0.0
  %1185 = vmatprep.subr.mxu0 0.0
  %1186 = vmatpush1.msra.mxu0 0.0
  %1187 = vmatprep.subr.mxu0 0.0
  %1188 = vmatpush1.msra.mxu0 0.0
  %1189 = vmatprep.subr.mxu0 0.0
  %1190 = vmatpush1.msra.mxu0 0.0
  %1191 = vmatprep.subr.mxu0 0.0
  %1192 = vmatpush1.msra.mxu0 0.0
  %1193 = vmatprep.subr.mxu0 0.0
  %1194 = vmatpush1.msra.mxu0 0.0
  %1195 = vmatprep.subr.mxu0 0.0
  %1196 = vmatpush1.msra.mxu0 0.0
  %1197 = vmatprep.subr.mxu0 0.0
  %1198 = vmatpush1.msra.mxu0 0.0
  %1199 = vmatprep.subr.mxu0 0.0
  %1200 = vmatpush1.msra.mxu0 0.0
  %1201 = vmatprep.subr.mxu0 0.0
  %1202 = vmatpush1.msra.mxu0 0.0
  %1203 = vmatprep.subr.mxu0 0.0
  %1204 = vmatpush1.msra.mxu0 0.0
  %1205 = vmatprep.subr.mxu0 0.0
  %1206 = vmatpush1.msra.mxu0 0.0
  %1207 = vmatprep.subr.mxu0 0.0
  %1208 = vmatpush1.msra.mxu0 0.0
  %1209 = vmatprep.subr.mxu0 0.0
  %1210 = vmatpush1.msra.mxu0 0.0
  %1211 = vmatprep.subr.mxu0 0.0
  %1212 = vmatpush1.msra.mxu0 0.0
  %1213 = vmatprep.subr.mxu0 0.0
  %1214 = vmatpush1.msra.mxu0 0.0
  %1215 = vmatprep.subr.mxu0 0.0
  %1216 = vmatpush1.msra.mxu0 0.0
  %1217 = vmatprep.subr.mxu0 0.0
  %1218 = vmatpush1.msra.mxu0 0.0
  %1219 = vmatprep.subr.mxu0 0.0
  %1220 = vmatpush1.msra.mxu0 0.0
  %1221 = vmatprep.subr.mxu0 0.0
  %1222 = vmatpush1.msra.mxu0 0.0
  %1223 = vmatprep.subr.mxu0 0.0
  %1224 = vmatpush1.msra.mxu0 0.0
  %1225 = vmatprep.subr.mxu0 0.0
  %1226 = vmatpush1.msra.mxu0 0.0
  %1227 = vmatprep.subr.mxu0 0.0
  %1228 = vmatpush1.msra.mxu0 0.0
  %1229 = vmatprep.subr.mxu0 0.0
  %1230 = vmatpush1.msra.mxu0 0.0
  %1231 = vmatprep.subr.mxu0 0.0
  %1232 = vmatpush1.msra.mxu0 0.0
  %1233 = vmatprep.mubr.f32.mxu0 0.0
  %1234 = vmatmul.mubr.f32.gmra.mrb[0].mxu0 %v1167
  %v1235 = vpop.f32.mrb[0].mxu0
  %v1236 = vadd.f32 0.0, %v1235
  %v1237 = vpop.f32.mrb[0].mxu0
  %1238 = vdwg.mxu0
  %v1239 = vadd.f32 %v1165, %v1236
  %v1240 = vtanh.pop %v1239
  %s1241 = scalar_lea.vmem [#allocation2], 48
  %v1242 = vld [vmem:[%s1241] sm:$0xff]
  %v1244 = vsel %vm182, %v1163, 0
  %1246 = vmatprep.subr.mxu0 0.0
  %1247 = vmatpush1.msra.mxu0 %v313
  %1248 = vmatprep.subr.mxu0 0.0
  %1249 = vmatpush1.msra.mxu0 %v314
  %1250 = vmatprep.subr.mxu0 0.0
  %1251 = vmatpush1.msra.mxu0 %v315
  %1252 = vmatprep.subr.mxu0 0.0
  %1253 = vmatpush1.msra.mxu0 %v316
  %1254 = vmatprep.subr.mxu0 0.0
  %1255 = vmatpush1.msra.mxu0 0.0
  %1256 = vmatprep.subr.mxu0 0.0
  %1257 = vmatpush1.msra.mxu0 0.0
  %1258 = vmatprep.subr.mxu0 0.0
  %1259 = vmatpush1.msra.mxu0 0.0
  %1260 = vmatprep.subr.mxu0 0.0
  %1261 = vmatpush1.msra.mxu0 0.0
  %1262 = vmatprep.subr.mxu0 0.0
  %1263 = vmatpush1.msra.mxu0 0.0
  %1264 = vmatprep.subr.mxu0 0.0
  %1265 = vmatpush1.msra.mxu0 0.0
  %1266 = vmatprep.subr.mxu0 0.0
  %1267 = vmatpush1.msra.mxu0 0.0
  %1268 = vmatprep.subr.mxu0 0.0
  %1269 = vmatpush1.msra.mxu0 0.0
  %1270 = vmatprep.subr.mxu0 0.0
  %1271 = vmatpush1.msra.mxu0 0.0
  %1272 = vmatprep.subr.mxu0 0.0
  %1273 = vmatpush1.msra.mxu0 0.0
  %1274 = vmatprep.subr.mxu0 0.0
  %1275 = vmatpush1.msra.mxu0 0.0
  %1276 = vmatprep.subr.mxu0 0.0
  %1277 = vmatpush1.msra.mxu0 0.0
  %1278 = vmatprep.subr.mxu0 0.0
  %1279 = vmatpush1.msra.mxu0 0.0
  %1280 = vmatprep.subr.mxu0 0.0
  %1281 = vmatpush1.msra.mxu0 0.0
  %1282 = vmatprep.subr.mxu0 0.0
  %1283 = vmatpush1.msra.mxu0 0.0
  %1284 = vmatprep.subr.mxu0 0.0
  %1285 = vmatpush1.msra.mxu0 0.0
  %1286 = vmatprep.subr.mxu0 0.0
  %1287 = vmatpush1.msra.mxu0 0.0
  %1288 = vmatprep.subr.mxu0 0.0
  %1289 = vmatpush1.msra.mxu0 0.0
  %1290 = vmatprep.subr.mxu0 0.0
  %1291 = vmatpush1.msra.mxu0 0.0
  %1292 = vmatprep.subr.mxu0 0.0
  %1293 = vmatpush1.msra.mxu0 0.0
  %1294 = vmatprep.subr.mxu0 0.0
  %1295 = vmatpush1.msra.mxu0 0.0
  %1296 = vmatprep.subr.mxu0 0.0
  %1297 = vmatpush1.msra.mxu0 0.0
  %1298 = vmatprep.subr.mxu0 0.0
  %1299 = vmatpush1.msra.mxu0 0.0
  %1300 = vmatprep.subr.mxu0 0.0
  %1301 = vmatpush1.msra.mxu0 0.0
  %1302 = vmatprep.subr.mxu0 0.0
  %1303 = vmatpush1.msra.mxu0 0.0
  %1304 = vmatprep.subr.mxu0 0.0
  %1305 = vmatpush1.msra.mxu0 0.0
  %1306 = vmatprep.subr.mxu0 0.0
  %1307 = vmatpush1.msra.mxu0 0.0
  %1308 = vmatprep.subr.mxu0 0.0
  %1309 = vmatpush1.msra.mxu0 0.0
  %1310 = vmatprep.mubr.f32.mxu0 0.0
  %1311 = vmatmul.mubr.f32.gmra.mrb[0].mxu0 %v1244
  %v1312 = vpop.f32.mrb[0].mxu0
  %v1313 = vadd.f32 0.0, %v1312
  %v1314 = vpop.f32.mrb[0].mxu0
  %1315 = vdwg.mxu0
  %v1316 = vadd.f32 %v1242, %v1313
  %v1317 = vtanh.pop %v1316
  %s1318 = scalar_lea.vmem [#allocation3], 8
  %v1319 = vld [vmem:[%s1318] sm:$0xff]
  %v1321 = vsel %vm182, %v1240, 0
  %1323 = vmatprep.subr.mxu0 0.0
  %1324 = vmatpush1.msra.mxu0 %v317
  %1325 = vmatprep.subr.mxu0 0.0
  %1326 = vmatpush1.msra.mxu0 %v318
  %1327 = vmatprep.subr.mxu0 0.0
  %1328 = vmatpush1.msra.mxu0 %v319
  %1329 = vmatprep.subr.mxu0 0.0
  %1330 = vmatpush1.msra.mxu0 %v320
  %1331 = vmatprep.subr.mxu0 0.0
  %1332 = vmatpush1.msra.mxu0 0.0
  %1333 = vmatprep.subr.mxu0 0.0
  %1334 = vmatpush1.msra.mxu0 0.0
  %1335 = vmatprep.subr.mxu0 0.0
  %1336 = vmatpush1.msra.mxu0 0.0
  %1337 = vmatprep.subr.mxu0 0.0
  %1338 = vmatpush1.msra.mxu0 0.0
  %1339 = vmatprep.subr.mxu0 0.0
  %1340 = vmatpush1.msra.mxu0 0.0
  %1341 = vmatprep.subr.mxu0 0.0
  %1342 = vmatpush1.msra.mxu0 0.0
  %1343 = vmatprep.subr.mxu0 0.0
  %1344 = vmatpush1.msra.mxu0 0.0
  %1345 = vmatprep.subr.mxu0 0.0
  %1346 = vmatpush1.msra.mxu0 0.0
  %1347 = vmatprep.subr.mxu0 0.0
  %1348 = vmatpush1.msra.mxu0 0.0
  %1349 = vmatprep.subr.mxu0 0.0
  %1350 = vmatpush1.msra.mxu0 0.0
  %1351 = vmatprep.subr.mxu0 0.0
  %1352 = vmatpush1.msra.mxu0 0.0
  %1353 = vmatprep.subr.mxu0 0.0
  %1354 = vmatpush1.msra.mxu0 0.0
  %1355 = vmatprep.subr.mxu0 0.0
  %1356 = vmatpush1.msra.mxu0 0.0
  %1357 = vmatprep.subr.mxu0 0.0
  %1358 = vmatpush1.msra.mxu0 0.0
  %1359 = vmatprep.subr.mxu0 0.0
  %1360 = vmatpush1.msra.mxu0 0.0
  %1361 = vmatprep.subr.mxu0 0.0
  %1362 = vmatpush1.msra.mxu0 0.0
  %1363 = vmatprep.subr.mxu0 0.0
  %1364 = vmatpush1.msra.mxu0 0.0
  %1365 = vmatprep.subr.mxu0 0.0
  %1366 = vmatpush1.msra.mxu0 0.0
  %1367 = vmatprep.subr.mxu0 0.0
  %1368 = vmatpush1.msra.mxu0 0.0
  %1369 = vmatprep.subr.mxu0 0.0
  %1370 = vmatpush1.msra.mxu0 0.0
  %1371 = vmatprep.subr.mxu0 0.0
  %1372 = vmatpush1.msra.mxu0 0.0
  %1373 = vmatprep.subr.mxu0 0.0
  %1374 = vmatpush1.msra.mxu0 0.0
  %1375 = vmatprep.subr.mxu0 0.0
  %1376 = vmatpush1.msra.mxu0 0.0
  %1377 = vmatprep.subr.mxu0 0.0
  %1378 = vmatpush1.msra.mxu0 0.0
  %1379 = vmatprep.subr.mxu0 0.0
  %1380 = vmatpush1.msra.mxu0 0.0
  %1381 = vmatprep.subr.mxu0 0.0
  %1382 = vmatpush1.msra.mxu0 0.0
  %1383 = vmatprep.subr.mxu0 0.0
  %1384 = vmatpush1.msra.mxu0 0.0
  %1385 = vmatprep.subr.mxu0 0.0
  %1386 = vmatpush1.msra.mxu0 0.0
  %1387 = vmatprep.mubr.f32.mxu0 0.0
  %1388 = vmatmul.mubr.f32.gmra.mrb[0].mxu0 %v1321
  %v1389 = vpop.f32.mrb[0].mxu0
  %v1390 = vadd.f32 0.0, %v1389
  %v1391 = vpop.f32.mrb[0].mxu0
  %1392 = vdwg.mxu0
  %v1393 = vadd.f32 %v1319, %v1390
  %v1394 = vtanh.pop %v1393
  %s1395 = scalar_lea.vmem [#allocation2], 56
  %v1396 = vld [vmem:[%s1395] sm:$0xff]
  %v1398 = vsel %vm182, %v1317, 0
  %1400 = vmatprep.subr.mxu0 0.0
  %1401 = vmatpush1.msra.mxu0 %v313
  %1402 = vmatprep.subr.mxu0 0.0
  %1403 = vmatpush1.msra.mxu0 %v314
  %1404 = vmatprep.subr.mxu0 0.0
  %1405 = vmatpush1.msra.mxu0 %v315
  %1406 = vmatprep.subr.mxu0 0.0
  %1407 = vmatpush1.msra.mxu0 %v316
  %1408 = vmatprep.subr.mxu0 0.0
  %1409 = vmatpush1.msra.mxu0 0.0
  %1410 = vmatprep.subr.mxu0 0.0
  %1411 = vmatpush1.msra.mxu0 0.0
  %1412 = vmatprep.subr.mxu0 0.0
  %1413 = vmatpush1.msra.mxu0 0.0
  %1414 = vmatprep.subr.mxu0 0.0
  %1415 = vmatpush1.msra.mxu0 0.0
  %1416 = vmatprep.subr.mxu0 0.0
  %1417 = vmatpush1.msra.mxu0 0.0
  %1418 = vmatprep.subr.mxu0 0.0
  %1419 = vmatpush1.msra.mxu0 0.0
  %1420 = vmatprep.subr.mxu0 0.0
  %1421 = vmatpush1.msra.mxu0 0.0
  %1422 = vmatprep.subr.mxu0 0.0
  %1423 = vmatpush1.msra.mxu0 0.0
  %1424 = vmatprep.subr.mxu0 0.0
  %1425 = vmatpush1.msra.mxu0 0.0
  %1426 = vmatprep.subr.mxu0 0.0
  %1427 = vmatpush1.msra.mxu0 0.0
  %1428 = vmatprep.subr.mxu0 0.0
  %1429 = vmatpush1.msra.mxu0 0.0
  %1430 = vmatprep.subr.mxu0 0.0
  %1431 = vmatpush1.msra.mxu0 0.0
  %1432 = vmatprep.subr.mxu0 0.0
  %1433 = vmatpush1.msra.mxu0 0.0
  %1434 = vmatprep.subr.mxu0 0.0
  %1435 = vmatpush1.msra.mxu0 0.0
  %1436 = vmatprep.subr.mxu0 0.0
  %1437 = vmatpush1.msra.mxu0 0.0
  %1438 = vmatprep.subr.mxu0 0.0
  %1439 = vmatpush1.msra.mxu0 0.0
  %1440 = vmatprep.subr.mxu0 0.0
  %1441 = vmatpush1.msra.mxu0 0.0
  %1442 = vmatprep.subr.mxu0 0.0
  %1443 = vmatpush1.msra.mxu0 0.0
  %1444 = vmatprep.subr.mxu0 0.0
  %1445 = vmatpush1.msra.mxu0 0.0
  %1446 = vmatprep.subr.mxu0 0.0
  %1447 = vmatpush1.msra.mxu0 0.0
  %1448 = vmatprep.subr.mxu0 0.0
  %1449 = vmatpush1.msra.mxu0 0.0
  %1450 = vmatprep.subr.mxu0 0.0
  %1451 = vmatpush1.msra.mxu0 0.0
  %1452 = vmatprep.subr.mxu0 0.0
  %1453 = vmatpush1.msra.mxu0 0.0
  %1454 = vmatprep.subr.mxu0 0.0
  %1455 = vmatpush1.msra.mxu0 0.0
  %1456 = vmatprep.subr.mxu0 0.0
  %1457 = vmatpush1.msra.mxu0 0.0
  %1458 = vmatprep.subr.mxu0 0.0
  %1459 = vmatpush1.msra.mxu0 0.0
  %1460 = vmatprep.subr.mxu0 0.0
  %1461 = vmatpush1.msra.mxu0 0.0
  %1462 = vmatprep.subr.mxu0 0.0
  %1463 = vmatpush1.msra.mxu0 0.0
  %1464 = vmatprep.mubr.f32.mxu0 0.0
  %1465 = vmatmul.mubr.f32.gmra.mrb[0].mxu0 %v1398
  %v1466 = vpop.f32.mrb[0].mxu0
  %v1467 = vadd.f32 0.0, %v1466
  %v1468 = vpop.f32.mrb[0].mxu0
  %1469 = vdwg.mxu0
  %v1470 = vadd.f32 %v1396, %v1467
  %v1471 = vtanh.pop %v1470
  %v1472 = vld [vmem:[#allocation3] sm:$0xff]
  %v1474 = vsel %vm182, %v1394, 0
  %1476 = vmatprep.subr.mxu0 0.0
  %1477 = vmatpush1.msra.mxu0 %v317
  %1478 = vmatprep.subr.mxu0 0.0
  %1479 = vmatpush1.msra.mxu0 %v318
  %1480 = vmatprep.subr.mxu0 0.0
  %1481 = vmatpush1.msra.mxu0 %v319
  %1482 = vmatprep.subr.mxu0 0.0
  %1483 = vmatpush1.msra.mxu0 %v320
  %1484 = vmatprep.subr.mxu0 0.0
  %1485 = vmatpush1.msra.mxu0 0.0
  %1486 = vmatprep.subr.mxu0 0.0
  %1487 = vmatpush1.msra.mxu0 0.0
  %1488 = vmatprep.subr.mxu0 0.0
  %1489 = vmatpush1.msra.mxu0 0.0
  %1490 = vmatprep.subr.mxu0 0.0
  %1491 = vmatpush1.msra.mxu0 0.0
  %1492 = vmatprep.subr.mxu0 0.0
  %1493 = vmatpush1.msra.mxu0 0.0
  %1494 = vmatprep.subr.mxu0 0.0
  %1495 = vmatpush1.msra.mxu0 0.0
  %1496 = vmatprep.subr.mxu0 0.0
  %1497 = vmatpush1.msra.mxu0 0.0
  %1498 = vmatprep.subr.mxu0 0.0
  %1499 = vmatpush1.msra.mxu0 0.0
  %1500 = vmatprep.subr.mxu0 0.0
  %1501 = vmatpush1.msra.mxu0 0.0
  %1502 = vmatprep.subr.mxu0 0.0
  %1503 = vmatpush1.msra.mxu0 0.0
  %1504 = vmatprep.subr.mxu0 0.0
  %1505 = vmatpush1.msra.mxu0 0.0
  %1506 = vmatprep.subr.mxu0 0.0
  %1507 = vmatpush1.msra.mxu0 0.0
  %1508 = vmatprep.subr.mxu0 0.0
  %1509 = vmatpush1.msra.mxu0 0.0
  %1510 = vmatprep.subr.mxu0 0.0
  %1511 = vmatpush1.msra.mxu0 0.0
  %1512 = vmatprep.subr.mxu0 0.0
  %1513 = vmatpush1.msra.mxu0 0.0
  %1514 = vmatprep.subr.mxu0 0.0
  %1515 = vmatpush1.msra.mxu0 0.0
  %1516 = vmatprep.subr.mxu0 0.0
  %1517 = vmatpush1.msra.mxu0 0.0
  %1518 = vmatprep.subr.mxu0 0.0
  %1519 = vmatpush1.msra.mxu0 0.0
  %1520 = vmatprep.subr.mxu0 0.0
  %1521 = vmatpush1.msra.mxu0 0.0
  %1522 = vmatprep.subr.mxu0 0.0
  %1523 = vmatpush1.msra.mxu0 0.0
  %1524 = vmatprep.subr.mxu0 0.0
  %1525 = vmatpush1.msra.mxu0 0.0
  %1526 = vmatprep.subr.mxu0 0.0
  %1527 = vmatpush1.msra.mxu0 0.0
  %1528 = vmatprep.subr.mxu0 0.0
  %1529 = vmatpush1.msra.mxu0 0.0
  %1530 = vmatprep.subr.mxu0 0.0
  %1531 = vmatpush1.msra.mxu0 0.0
  %1532 = vmatprep.subr.mxu0 0.0
  %1533 = vmatpush1.msra.mxu0 0.0
  %1534 = vmatprep.subr.mxu0 0.0
  %1535 = vmatpush1.msra.mxu0 0.0
  %1536 = vmatprep.subr.mxu0 0.0
  %1537 = vmatpush1.msra.mxu0 0.0
  %1538 = vmatprep.subr.mxu0 0.0
  %1539 = vmatpush1.msra.mxu0 0.0
  %1540 = vmatprep.mubr.f32.mxu0 0.0
  %1541 = vmatmul.mubr.f32.gmra.mrb[0].mxu0 %v1474
  %v1542 = vpop.f32.mrb[0].mxu0
  %v1543 = vadd.f32 0.0, %v1542
  %v1544 = vpop.f32.mrb[0].mxu0
  %1545 = vdwg.mxu0
  %v1546 = vadd.f32 %v1472, %v1543
  %v1547 = vtanh.pop %v1546
  %v1548 = vld [vmem:[%s7] sm:$0xff]
  %v1549 = vld [vmem:[%s7 + $0x8] sm:$0xff]
  %v1550 = vld [vmem:[%s7 + $0x10] sm:$0xff]
  %v1551 = vld [vmem:[%s7 + $0x18] sm:$0xff]
  %v1552 = vld [vmem:[%s8] sm:$0xff]
  %v1553 = vld [vmem:[%s8 + $0x8] sm:$0xff]
  %v1554 = vld [vmem:[%s8 + $0x10] sm:$0xff]
  %v1555 = vld [vmem:[%s8 + $0x18] sm:$0xff]
  %v1557 = vsel %vm182, %v1547, 0
  %1559 = vmatprep.subr.mxu0 0.0
  %1560 = vmatpush1.msra.mxu0 %v1552
  %1561 = vmatprep.subr.mxu0 0.0
  %1562 = vmatpush1.msra.mxu0 %v1553
  %1563 = vmatprep.subr.mxu0 0.0
  %1564 = vmatpush1.msra.mxu0 %v1554
  %1565 = vmatprep.subr.mxu0 0.0
  %1566 = vmatpush1.msra.mxu0 %v1555
  %1567 = vmatprep.subr.mxu0 0.0
  %1568 = vmatpush1.msra.mxu0 0.0
  %1569 = vmatprep.subr.mxu0 0.0
  %1570 = vmatpush1.msra.mxu0 0.0
  %1571 = vmatprep.subr.mxu0 0.0
  %1572 = vmatpush1.msra.mxu0 0.0
  %1573 = vmatprep.subr.mxu0 0.0
  %1574 = vmatpush1.msra.mxu0 0.0
  %1575 = vmatprep.subr.mxu0 0.0
  %1576 = vmatpush1.msra.mxu0 0.0
  %1577 = vmatprep.subr.mxu0 0.0
  %1578 = vmatpush1.msra.mxu0 0.0
  %1579 = vmatprep.subr.mxu0 0.0
  %1580 = vmatpush1.msra.mxu0 0.0
  %1581 = vmatprep.subr.mxu0 0.0
  %1582 = vmatpush1.msra.mxu0 0.0
  %1583 = vmatprep.subr.mxu0 0.0
  %1584 = vmatpush1.msra.mxu0 0.0
  %1585 = vmatprep.subr.mxu0 0.0
  %1586 = vmatpush1.msra.mxu0 0.0
  %1587 = vmatprep.subr.mxu0 0.0
  %1588 = vmatpush1.msra.mxu0 0.0
  %1589 = vmatprep.subr.mxu0 0.0
  %1590 = vmatpush1.msra.mxu0 0.0
  %1591 = vmatprep.subr.mxu0 0.0
  %1592 = vmatpush1.msra.mxu0 0.0
  %1593 = vmatprep.subr.mxu0 0.0
  %1594 = vmatpush1.msra.mxu0 0.0
  %1595 = vmatprep.subr.mxu0 0.0
  %1596 = vmatpush1.msra.mxu0 0.0
  %1597 = vmatprep.subr.mxu0 0.0
  %1598 = vmatpush1.msra.mxu0 0.0
  %1599 = vmatprep.subr.mxu0 0.0
  %1600 = vmatpush1.msra.mxu0 0.0
  %1601 = vmatprep.subr.mxu0 0.0
  %1602 = vmatpush1.msra.mxu0 0.0
  %1603 = vmatprep.subr.mxu0 0.0
  %1604 = vmatpush1.msra.mxu0 0.0
  %1605 = vmatprep.subr.mxu0 0.0
  %1606 = vmatpush1.msra.mxu0 0.0
  %1607 = vmatprep.subr.mxu0 0.0
  %1608 = vmatpush1.msra.mxu0 0.0
  %1609 = vmatprep.subr.mxu0 0.0
  %1610 = vmatpush1.msra.mxu0 0.0
  %1611 = vmatprep.subr.mxu0 0.0
  %1612 = vmatpush1.msra.mxu0 0.0
  %1613 = vmatprep.subr.mxu0 0.0
  %1614 = vmatpush1.msra.mxu0 0.0
  %1615 = vmatprep.subr.mxu0 0.0
  %1616 = vmatpush1.msra.mxu0 0.0
  %1617 = vmatprep.subr.mxu0 0.0
  %1618 = vmatpush1.msra.mxu0 0.0
  %1619 = vmatprep.subr.mxu0 0.0
  %1620 = vmatpush1.msra.mxu0 0.0
  %1621 = vmatprep.subr.mxu0 0.0
  %1622 = vmatpush1.msra.mxu0 0.0
  %1623 = vmatprep.mubr.f32.mxu0 0.0
  %1624 = vmatmul.mubr.f32.gmra.mrb[0].mxu0 %v1557
  %v1625 = vpop.f32.mrb[0].mxu0
  %v1626 = vadd.f32 0.0, %v1625
  %v1627 = vpop.f32.mrb[0].mxu0
  %1628 = vdwg.mxu0
  %v1630 = vsel %vm182, %v1471, 0
  %1632 = vmatprep.subr.mxu0 0.0
  %1633 = vmatpush1.msra.mxu0 %v1548
  %1634 = vmatprep.subr.mxu0 0.0
  %1635 = vmatpush1.msra.mxu0 %v1549
  %1636 = vmatprep.subr.mxu0 0.0
  %1637 = vmatpush1.msra.mxu0 %v1550
  %1638 = vmatprep.subr.mxu0 0.0
  %1639 = vmatpush1.msra.mxu0 %v1551
  %1640 = vmatprep.subr.mxu0 0.0
  %1641 = vmatpush1.msra.mxu0 0.0
  %1642 = vmatprep.subr.mxu0 0.0
  %1643 = vmatpush1.msra.mxu0 0.0
  %1644 = vmatprep.subr.mxu0 0.0
  %1645 = vmatpush1.msra.mxu0 0.0
  %1646 = vmatprep.subr.mxu0 0.0
  %1647 = vmatpush1.msra.mxu0 0.0
  %1648 = vmatprep.subr.mxu0 0.0
  %1649 = vmatpush1.msra.mxu0 0.0
  %1650 = vmatprep.subr.mxu0 0.0
  %1651 = vmatpush1.msra.mxu0 0.0
  %1652 = vmatprep.subr.mxu0 0.0
  %1653 = vmatpush1.msra.mxu0 0.0
  %1654 = vmatprep.subr.mxu0 0.0
  %1655 = vmatpush1.msra.mxu0 0.0
  %1656 = vmatprep.subr.mxu0 0.0
  %1657 = vmatpush1.msra.mxu0 0.0
  %1658 = vmatprep.subr.mxu0 0.0
  %1659 = vmatpush1.msra.mxu0 0.0
  %1660 = vmatprep.subr.mxu0 0.0
  %1661 = vmatpush1.msra.mxu0 0.0
  %1662 = vmatprep.subr.mxu0 0.0
  %1663 = vmatpush1.msra.mxu0 0.0
  %1664 = vmatprep.subr.mxu0 0.0
  %1665 = vmatpush1.msra.mxu0 0.0
  %1666 = vmatprep.subr.mxu0 0.0
  %1667 = vmatpush1.msra.mxu0 0.0
  %1668 = vmatprep.subr.mxu0 0.0
  %1669 = vmatpush1.msra.mxu0 0.0
  %1670 = vmatprep.subr.mxu0 0.0
  %1671 = vmatpush1.msra.mxu0 0.0
  %1672 = vmatprep.subr.mxu0 0.0
  %1673 = vmatpush1.msra.mxu0 0.0
  %1674 = vmatprep.subr.mxu0 0.0
  %1675 = vmatpush1.msra.mxu0 0.0
  %1676 = vmatprep.subr.mxu0 0.0
  %1677 = vmatpush1.msra.mxu0 0.0
  %1678 = vmatprep.subr.mxu0 0.0
  %1679 = vmatpush1.msra.mxu0 0.0
  %1680 = vmatprep.subr.mxu0 0.0
  %1681 = vmatpush1.msra.mxu0 0.0
  %1682 = vmatprep.subr.mxu0 0.0
  %1683 = vmatpush1.msra.mxu0 0.0
  %1684 = vmatprep.subr.mxu0 0.0
  %1685 = vmatpush1.msra.mxu0 0.0
  %1686 = vmatprep.subr.mxu0 0.0
  %1687 = vmatpush1.msra.mxu0 0.0
  %1688 = vmatprep.subr.mxu0 0.0
  %1689 = vmatpush1.msra.mxu0 0.0
  %1690 = vmatprep.subr.mxu0 0.0
  %1691 = vmatpush1.msra.mxu0 0.0
  %1692 = vmatprep.subr.mxu0 0.0
  %1693 = vmatpush1.msra.mxu0 0.0
  %1694 = vmatprep.subr.mxu0 0.0
  %1695 = vmatpush1.msra.mxu0 0.0
  %1696 = vmatprep.mubr.f32.mxu0 0.0
  %1697 = vmatmul.mubr.f32.gmra.mrb[0].mxu0 %v1630
  %v1698 = vpop.f32.mrb[0].mxu0
  %v1699 = vadd.f32 %v1626, %v1698
  %v1700 = vpop.f32.mrb[0].mxu0
  %1701 = vdwg.mxu0
  %v1702 = vld [vmem:[%s9] sm:$0x1]
  %v1704 = vlaneseq
  %v1705 = vshrl.u32 %v1704, 7
  %v1706 = vsub.s32 0, %v1705
  %v1707 = vrot.slane %v1702, %v1706
  %v1709 = vadd.f32 %v1699, %v1707
  %vm1710 = vcmask 23552
  %1711 = vst.msk [vmem:[%s10] sm:$0xff] %vm1710, %v1709
  // Predicated region
  $region42: #{tpu_custom_call.1} parent=0 // pred_check
    _
  $region43: #{tpu_custom_call.1} parent=0 // pred_check_branch
    %1713 = sbr.rel (0) target = $region45
  $region44: #{tpu_custom_call.1} parent=0 // pred_region
    _
  $region45: #{tpu_custom_call.1} parent=0 // pred_fallthru
    _
  // Predicated region
  $region46: #{tpu_custom_call.1} parent=0 // pred_check
    _
  $region47: #{tpu_custom_call.1} parent=0 // pred_check_branch
    %1715 = sbr.rel (0) target = $region49
  $region48: #{tpu_custom_call.1} parent=0 // pred_region
    _
  $region49: #{tpu_custom_call.1} parent=0 // pred_fallthru
    _

</llo_original>
